<compile_context>
chip_gen: v5e
topology: v5e:2x2
jax: 0.10.0
libtpu: 0.0.40
codegen_flags: <defaults>
</compile_context>

<pallas_src>
import jax
import jax.numpy as jnp
from jax import lax
from jax.experimental import pallas as pl
from jax.experimental.pallas import tpu as pltpu

KSIZE = 5
STRIDE = 2
PAD = 2


# ----------------------------- Pallas kernel -----------------------------------
def _matmul_bias_kernel(x_ref, w_ref, b_ref, o_ref):
    # Single MXU matmul, f32 accumulation, bias fused.  Output block is (M, Co):
    # Co is the lane dim -> lane-dense stores for the 128/256-channel layers.
    o_ref[...] = (
        jnp.dot(x_ref[...], w_ref[...], preferred_element_type=jnp.float32)
        + b_ref[...]
    )


def _matmul_bias(x2d, w2d, b_row):
    """x2d:(M, Kc)  w2d:(Kc, Co)  b_row:(1, Co)  ->  (M, Co) f32."""
    M, _ = x2d.shape
    Co = w2d.shape[1]
    return pl.pallas_call(
        _matmul_bias_kernel,
        out_shape=jax.ShapeDtypeStruct((M, Co), jnp.float32),
        # No grid: whole operands resident in VMEM (total footprint << VMEM on
        # v5e/v6e/v7x), single kernel invocation per layer.
        in_specs=[
            pl.BlockSpec(memory_space=pltpu.MemorySpace.VMEM),
            pl.BlockSpec(memory_space=pltpu.MemorySpace.VMEM),
            pl.BlockSpec(memory_space=pltpu.MemorySpace.VMEM),
        ],
        out_specs=pl.BlockSpec(memory_space=pltpu.MemorySpace.VMEM),
    )(x2d, w2d, b_row)


# ----------------------------- conv layers (NLC layout) -------------------------
def encoder_conv1d_nlc(x_nlc, w, b):
    """Conv1d(k=5, stride=2, padding=2).  x:(N,L,Ci)  w:(Co,Ci,K)  b:(Co,) -> (N,Lo,Co)."""
    N, L, Ci = x_nlc.shape
    Co, _, K = w.shape
    Lo = (L + 2 * PAD - K) // STRIDE + 1
    xp = jnp.pad(x_nlc, ((0, 0), (PAD, PAD), (0, 0)))
    taps = [
        lax.slice(xp, (0, k, 0), (N, k + STRIDE * (Lo - 1) + 1, Ci), (1, STRIDE, 1))
        for k in range(K)
    ]
    # im2col: column index = k*Ci + ci
    x2d = jnp.concatenate(taps, axis=-1).reshape(N * Lo, K * Ci)
    # weight matrix: row index k*Ci + ci, col = co
    w2d = jnp.transpose(w, (2, 1, 0)).reshape(K * Ci, Co)
    y2d = _matmul_bias(x2d, w2d, b.reshape(1, Co))
    return y2d.reshape(N, Lo, Co)


def decoder_convtranspose1d_nlc(x_nlc, w, b):
    """ConvTranspose1d(k=5, stride=2, padding=2), polyphase form.
    x:(N,L,Ci)  w:(Ci,Co,K)  b:(Co,)  ->  (N, 2L-1, Co)

    y[2m]   = w[:,:,4] @ x[m-1] + w[:,:,2] @ x[m] + w[:,:,0] @ x[m+1]
    y[2m+1] =                     w[:,:,3] @ x[m] + w[:,:,1] @ x[m+1]
    (x[-1] = x[L] = 0).  Both phases share one im2col and are computed by a single
    matmul with the two weight sets concatenated along the output/lane dim.
    """
    N, L, Ci = x_nlc.shape
    _, Co, K = w.shape
    assert K == KSIZE and STRIDE == 2 and PAD == 2
    Lo = (L - 1) * STRIDE - 2 * PAD + K  # = 2L - 1

    xp = jnp.pad(x_nlc, ((0, 0), (1, 1), (0, 0)))
    # rows m = 0..L-1; columns [x[m-1] | x[m] | x[m+1]], each of width Ci
    x2d = jnp.concatenate(
        [xp[:, 0:L, :], xp[:, 1:L + 1, :], xp[:, 2:L + 2, :]], axis=-1
    ).reshape(N * L, 3 * Ci)

    w_even = jnp.concatenate([w[:, :, 4], w[:, :, 2], w[:, :, 0]], axis=0)  # (3Ci, Co)
    w_odd = jnp.concatenate(
        [jnp.zeros((Ci, Co), w.dtype), w[:, :, 3], w[:, :, 1]], axis=0
    )                                                                        # (3Ci, Co)
    w2d = jnp.concatenate([w_even, w_odd], axis=-1)                          # (3Ci, 2Co)
    b2 = jnp.concatenate([b, b]).reshape(1, 2 * Co)

    y2d = _matmul_bias(x2d, w2d, b2)                     # (N*L, 2Co)
    y = y2d.reshape(N, L, 2, Co).reshape(N, 2 * L, Co)   # interleave even/odd phases
    return y[:, :Lo, :]                                  # drop the invalid last odd row


def _fit_length(x_ncl, original_size):
    L = x_ncl.shape[2]
    if L > original_size:
        return x_ncl[:, :, :original_size]
    if L < original_size:
        return jnp.pad(x_ncl, ((0, 0), (0, 0), (0, original_size - L)))
    return x_ncl


# ----------------------------- model -------------------------------------------
def init_params(key, en_channel, de_channel, K=KSIZE):
    params = {"enc": [], "dec": []}
    for i in range(len(en_channel) - 1):
        ci, co = en_channel[i], en_channel[i + 1]
        key, kw, kb = jax.random.split(key, 3)
        bound = (6.0 / (ci * K + co * K)) ** 0.5  # xavier_uniform, gain('linear')=1
        w = jax.random.uniform(kw, (co, ci, K), jnp.float32, -bound, bound)
        bb = 1.0 / ((ci * K) ** 0.5)
        b = jax.random.uniform(kb, (co,), jnp.float32, -bb, bb)
        params["enc"].append((w, b))
    for i in range(len(de_channel) - 1):
        ci, co = de_channel[i], de_channel[i + 1]
        key, kw, kb = jax.random.split(key, 3)
        bound = 1.0 / ((co * K) ** 0.5)
        w = jax.random.uniform(kw, (ci, co, K), jnp.float32, -bound, bound)
        b = jax.random.uniform(kb, (co,), jnp.float32, -bound, bound)
        params["dec"].append((w, b))
    return params


def noise_remover_forward(params, x):
    original_size = x.shape[2]
    a = jnp.transpose(x, (0, 2, 1))          # NCL -> NLC (channels = lane dim)
    for (w, b) in params["enc"]:
        a = encoder_conv1d_nlc(a, w, b)
    for (w, b) in params["dec"]:
        a = decoder_convtranspose1d_nlc(a, w, b)
    y = jnp.transpose(a, (0, 2, 1))          # NLC -> NCL
    return _fit_length(y, original_size)


# ----------------------------- pure-JAX reference -------------------------------
def _reference_forward(params, x):
    original_size = x.shape[2]
    dn = ("NCH", "OIH", "NCH")
    for (w, b) in params["enc"]:
        x = lax.conv_general_dilated(x, w, (STRIDE,), [(PAD, PAD)],
                                     dimension_numbers=dn) + b[None, :, None]
    for (w, b) in params["dec"]:
        wf = jnp.transpose(w[:, :, ::-1], (1, 0, 2))  # (Co, Ci, K), flipped
        x = lax.conv_general_dilated(x, wf, (1,), [(KSIZE - 1 - PAD,) * 2],
                                     lhs_dilation=(STRIDE,),
                                     dimension_numbers=dn) + b[None, :, None]
    return _fit_length(x, original_size)


# ----------------------------- main ---------------------------------------------
if __name__ == "__main__":
    en_channel = [1, 64, 128, 256]
    de_channel = [256, 128, 64, 1]

    key = jax.random.PRNGKey(0)
    key, kx, kp = jax.random.split(key, 3)
    x = jax.random.normal(kx, (2, 1, 64), jnp.float32)   # (N=2, C=1, L=64), NCL
    params = init_params(kp, en_channel, de_channel)

    fwd = jax.jit(noise_remover_forward)
    out = jax.block_until_ready(fwd(params, x))

    ref = jax.block_until_ready(_reference_forward(params, x))
    assert out.shape == (2, 1, 64), out.shape
    assert jnp.allclose(out, ref, rtol=2e-2, atol=2e-3), "mismatch vs. reference"

    # TODO(synk): PyTorch's `.to('cuda')` device move in Decoder has no Pallas meaning (no-op here).
    print("KERNEL_OK")
</pallas_src>

<mosaic_0001>
module attributes {stable_mosaic.version = 11 : i64} {
  func.func @_matmul_bias_kernel(%arg0: memref<64x5xf32, #tpu.memory_space<vmem>>, %arg1: memref<5x64xf32, #tpu.memory_space<vmem>>, %arg2: memref<1x64xf32, #tpu.memory_space<vmem>>, %arg3: memref<64x64xf32, #tpu.memory_space<vmem>>) attributes {dimension_semantics = [], scalar_prefetch = 0 : i64, scratch_operands = 0 : i64, tpu.core_type = #tpu.core_type<tc>} {
    %c0 = arith.constant 0 : index
    %c0_0 = arith.constant 0 : index
    %0 = vector.load %arg0[%c0, %c0_0] : memref<64x5xf32, #tpu.memory_space<vmem>>, vector<64x5xf32>
    %c0_1 = arith.constant 0 : index
    %c0_2 = arith.constant 0 : index
    %1 = vector.load %arg1[%c0_1, %c0_2] : memref<5x64xf32, #tpu.memory_space<vmem>>, vector<5x64xf32>
    %cst = arith.constant dense<0.000000e+00> : vector<64x64xf32>
    %2 = tpu.matmul %0, %1, %cst {dimension_numbers = #tpu.dot_dimension_numbers<[1], [0], [0], [1], [0, 0, 1, 1], [], []>} : vector<64x5xf32>, vector<5x64xf32>, vector<64x64xf32> -> vector<64x64xf32>
    %c0_3 = arith.constant 0 : index
    %c0_4 = arith.constant 0 : index
    %3 = vector.load %arg2[%c0_3, %c0_4] : memref<1x64xf32, #tpu.memory_space<vmem>>, vector<1x64xf32>
    %4 = vector.broadcast %3 : vector<1x64xf32> to vector<64x64xf32>
    %5 = arith.addf %2, %4 : vector<64x64xf32>
    %c0_5 = arith.constant 0 : index
    %c0_6 = arith.constant 0 : index
    %6 = vector.load %arg3[%c0_5, %c0_6] : memref<64x64xf32, #tpu.memory_space<vmem>>, vector<64x64xf32>
    tpu.vector_store %arg3[%c0_5, %c0_6], %5 {strides = array<i32>} : memref<64x64xf32, #tpu.memory_space<vmem>>, vector<64x64xf32>,
    return
  }
}

module attributes {stable_mosaic.version = 11 : i64} {
  func.func @_matmul_bias_kernel(%arg0: memref<32x320xf32, #tpu.memory_space<vmem>>, %arg1: memref<320x128xf32, #tpu.memory_space<vmem>>, %arg2: memref<1x128xf32, #tpu.memory_space<vmem>>, %arg3: memref<32x128xf32, #tpu.memory_space<vmem>>) attributes {dimension_semantics = [], scalar_prefetch = 0 : i64, scratch_operands = 0 : i64, tpu.core_type = #tpu.core_type<tc>} {
    %c0 = arith.constant 0 : index
    %c0_0 = arith.constant 0 : index
    %0 = vector.load %arg0[%c0, %c0_0] : memref<32x320xf32, #tpu.memory_space<vmem>>, vector<32x320xf32>
    %c0_1 = arith.constant 0 : index
    %c0_2 = arith.constant 0 : index
    %1 = vector.load %arg1[%c0_1, %c0_2] : memref<320x128xf32, #tpu.memory_space<vmem>>, vector<320x128xf32>
    %cst = arith.constant dense<0.000000e+00> : vector<32x128xf32>
    %2 = tpu.matmul %0, %1, %cst {dimension_numbers = #tpu.dot_dimension_numbers<[1], [0], [0], [1], [0, 0, 1, 1], [], []>} : vector<32x320xf32>, vector<320x128xf32>, vector<32x128xf32> -> vector<32x128xf32>
    %c0_3 = arith.constant 0 : index
    %c0_4 = arith.constant 0 : index
    %3 = vector.load %arg2[%c0_3, %c0_4] : memref<1x128xf32, #tpu.memory_space<vmem>>, vector<1x128xf32>
    %4 = vector.broadcast %3 : vector<1x128xf32> to vector<32x128xf32>
    %5 = arith.addf %2, %4 : vector<32x128xf32>
    %c0_5 = arith.constant 0 : index
    %c0_6 = arith.constant 0 : index
    %6 = vector.load %arg3[%c0_5, %c0_6] : memref<32x128xf32, #tpu.memory_space<vmem>>, vector<32x128xf32>
    tpu.vector_store %arg3[%c0_5, %c0_6], %5 {strides = array<i32>} : memref<32x128xf32, #tpu.memory_space<vmem>>, vector<32x128xf32>,
    return
  }
}

module attributes {stable_mosaic.version = 11 : i64} {
  func.func @_matmul_bias_kernel(%arg0: memref<16x640xf32, #tpu.memory_space<vmem>>, %arg1: memref<640x256xf32, #tpu.memory_space<vmem>>, %arg2: memref<1x256xf32, #tpu.memory_space<vmem>>, %arg3: memref<16x256xf32, #tpu.memory_space<vmem>>) attributes {dimension_semantics = [], scalar_prefetch = 0 : i64, scratch_operands = 0 : i64, tpu.core_type = #tpu.core_type<tc>} {
    %c0 = arith.constant 0 : index
    %c0_0 = arith.constant 0 : index
    %0 = vector.load %arg0[%c0, %c0_0] : memref<16x640xf32, #tpu.memory_space<vmem>>, vector<16x640xf32>
    %c0_1 = arith.constant 0 : index
    %c0_2 = arith.constant 0 : index
    %1 = vector.load %arg1[%c0_1, %c0_2] : memref<640x256xf32, #tpu.memory_space<vmem>>, vector<640x256xf32>
    %cst = arith.constant dense<0.000000e+00> : vector<16x256xf32>
    %2 = tpu.matmul %0, %1, %cst {dimension_numbers = #tpu.dot_dimension_numbers<[1], [0], [0], [1], [0, 0, 1, 1], [], []>} : vector<16x640xf32>, vector<640x256xf32>, vector<16x256xf32> -> vector<16x256xf32>
    %c0_3 = arith.constant 0 : index
    %c0_4 = arith.constant 0 : index
    %3 = vector.load %arg2[%c0_3, %c0_4] : memref<1x256xf32, #tpu.memory_space<vmem>>, vector<1x256xf32>
    %4 = vector.broadcast %3 : vector<1x256xf32> to vector<16x256xf32>
    %5 = arith.addf %2, %4 : vector<16x256xf32>
    %c0_5 = arith.constant 0 : index
    %c0_6 = arith.constant 0 : index
    %6 = vector.load %arg3[%c0_5, %c0_6] : memref<16x256xf32, #tpu.memory_space<vmem>>, vector<16x256xf32>
    tpu.vector_store %arg3[%c0_5, %c0_6], %5 {strides = array<i32>} : memref<16x256xf32, #tpu.memory_space<vmem>>, vector<16x256xf32>,
    return
  }
}

module attributes {stable_mosaic.version = 11 : i64} {
  func.func @_matmul_bias_kernel(%arg0: memref<16x768xf32, #tpu.memory_space<vmem>>, %arg1: memref<768x256xf32, #tpu.memory_space<vmem>>, %arg2: memref<1x256xf32, #tpu.memory_space<vmem>>, %arg3: memref<16x256xf32, #tpu.memory_space<vmem>>) attributes {dimension_semantics = [], scalar_prefetch = 0 : i64, scratch_operands = 0 : i64, tpu.core_type = #tpu.core_type<tc>} {
    %c0 = arith.constant 0 : index
    %c0_0 = arith.constant 0 : index
    %0 = vector.load %arg0[%c0, %c0_0] : memref<16x768xf32, #tpu.memory_space<vmem>>, vector<16x768xf32>
    %c0_1 = arith.constant 0 : index
    %c0_2 = arith.constant 0 : index
    %1 = vector.load %arg1[%c0_1, %c0_2] : memref<768x256xf32, #tpu.memory_space<vmem>>, vector<768x256xf32>
    %cst = arith.constant dense<0.000000e+00> : vector<16x256xf32>
    %2 = tpu.matmul %0, %1, %cst {dimension_numbers = #tpu.dot_dimension_numbers<[1], [0], [0], [1], [0, 0, 1, 1], [], []>} : vector<16x768xf32>, vector<768x256xf32>, vector<16x256xf32> -> vector<16x256xf32>
    %c0_3 = arith.constant 0 : index
    %c0_4 = arith.constant 0 : index
    %3 = vector.load %arg2[%c0_3, %c0_4] : memref<1x256xf32, #tpu.memory_space<vmem>>, vector<1x256xf32>
    %4 = vector.broadcast %3 : vector<1x256xf32> to vector<16x256xf32>
    %5 = arith.addf %2, %4 : vector<16x256xf32>
    %c0_5 = arith.constant 0 : index
    %c0_6 = arith.constant 0 : index
    %6 = vector.load %arg3[%c0_5, %c0_6] : memref<16x256xf32, #tpu.memory_space<vmem>>, vector<16x256xf32>
    tpu.vector_store %arg3[%c0_5, %c0_6], %5 {strides = array<i32>} : memref<16x256xf32, #tpu.memory_space<vmem>>, vector<16x256xf32>,
    return
  }
}

module attributes {stable_mosaic.version = 11 : i64} {
  func.func @_matmul_bias_kernel(%arg0: memref<30x384xf32, #tpu.memory_space<vmem>>, %arg1: memref<384x128xf32, #tpu.memory_space<vmem>>, %arg2: memref<1x128xf32, #tpu.memory_space<vmem>>, %arg3: memref<30x128xf32, #tpu.memory_space<vmem>>) attributes {dimension_semantics = [], scalar_prefetch = 0 : i64, scratch_operands = 0 : i64, tpu.core_type = #tpu.core_type<tc>} {
    %c0 = arith.constant 0 : index
    %c0_0 = arith.constant 0 : index
    %0 = vector.load %arg0[%c0, %c0_0] : memref<30x384xf32, #tpu.memory_space<vmem>>, vector<30x384xf32>
    %c0_1 = arith.constant 0 : index
    %c0_2 = arith.constant 0 : index
    %1 = vector.load %arg1[%c0_1, %c0_2] : memref<384x128xf32, #tpu.memory_space<vmem>>, vector<384x128xf32>
    %cst = arith.constant dense<0.000000e+00> : vector<30x128xf32>
    %2 = tpu.matmul %0, %1, %cst {dimension_numbers = #tpu.dot_dimension_numbers<[1], [0], [0], [1], [0, 0, 1, 1], [], []>} : vector<30x384xf32>, vector<384x128xf32>, vector<30x128xf32> -> vector<30x128xf32>
    %c0_3 = arith.constant 0 : index
    %c0_4 = arith.constant 0 : index
    %3 = vector.load %arg2[%c0_3, %c0_4] : memref<1x128xf32, #tpu.memory_space<vmem>>, vector<1x128xf32>
    %4 = vector.broadcast %3 : vector<1x128xf32> to vector<30x128xf32>
    %5 = arith.addf %2, %4 : vector<30x128xf32>
    %c0_5 = arith.constant 0 : index
    %c0_6 = arith.constant 0 : index
    %6 = vector.load %arg3[%c0_5, %c0_6] : memref<30x128xf32, #tpu.memory_space<vmem>>, vector<30x128xf32>
    tpu.vector_store %arg3[%c0_5, %c0_6], %5 {strides = array<i32>} : memref<30x128xf32, #tpu.memory_space<vmem>>, vector<30x128xf32>,
    return
  }
}

module attributes {stable_mosaic.version = 11 : i64} {
  func.func @_matmul_bias_kernel(%arg0: memref<58x192xf32, #tpu.memory_space<vmem>>, %arg1: memref<192x2xf32, #tpu.memory_space<vmem>>, %arg2: memref<1x2xf32, #tpu.memory_space<vmem>>, %arg3: memref<58x2xf32, #tpu.memory_space<vmem>>) attributes {dimension_semantics = [], scalar_prefetch = 0 : i64, scratch_operands = 0 : i64, tpu.core_type = #tpu.core_type<tc>} {
    %c0 = arith.constant 0 : index
    %c0_0 = arith.constant 0 : index
    %0 = vector.load %arg0[%c0, %c0_0] : memref<58x192xf32, #tpu.memory_space<vmem>>, vector<58x192xf32>
    %c0_1 = arith.constant 0 : index
    %c0_2 = arith.constant 0 : index
    %1 = vector.load %arg1[%c0_1, %c0_2] : memref<192x2xf32, #tpu.memory_space<vmem>>, vector<192x2xf32>
    %cst = arith.constant dense<0.000000e+00> : vector<58x2xf32>
    %2 = tpu.matmul %0, %1, %cst {dimension_numbers = #tpu.dot_dimension_numbers<[1], [0], [0], [1], [0, 0, 1, 1], [], []>} : vector<58x192xf32>, vector<192x2xf32>, vector<58x2xf32> -> vector<58x2xf32>
    %c0_3 = arith.constant 0 : index
    %c0_4 = arith.constant 0 : index
    %3 = vector.load %arg2[%c0_3, %c0_4] : memref<1x2xf32, #tpu.memory_space<vmem>>, vector<1x2xf32>
    %4 = vector.broadcast %3 : vector<1x2xf32> to vector<58x2xf32>
    %5 = arith.addf %2, %4 : vector<58x2xf32>
    %c0_5 = arith.constant 0 : index
    %c0_6 = arith.constant 0 : index
    %6 = vector.load %arg3[%c0_5, %c0_6] : memref<58x2xf32, #tpu.memory_space<vmem>>, vector<58x2xf32>
    tpu.vector_store %arg3[%c0_5, %c0_6], %5 {strides = array<i32>} : memref<58x2xf32, #tpu.memory_space<vmem>>, vector<58x2xf32>,
    return
  }
}

</mosaic_0001>

<llo_original>
// kernel: noise_remover_forward.7
$region0: #{noise_remover_forward.7}
  #allocation0 [shape = 'u32[]', space=smem, size = 0x4, offset = 0x4, fixed_abs, tag = 'smem constant byte address 0x4 - core index']
  #allocation1 [shape = 'u32[72,128]{1,0:T(1,128)}', space=vmem, size = 0x9000, scoped, tag = 'internal scratch']
  %s0 = inlined_call_operand.vmem [shape: f32[32,320], index: 0, kind: input, shape index: {}]
  %s1 = inlined_call_operand.vmem [shape: f32[320,128], index: 1, kind: input, shape index: {}]
  %s2 = inlined_call_operand.vmem [shape: f32[1,128], index: 2, kind: input, shape index: {}]
  %s3 = inlined_call_operand.vmem [shape: f32[32,128], index: 3, kind: output, shape index: {}]
  %s4 = sld [smem:[#allocation0]]
  $region22: #{noise_remover_forward.7} parent=0
    _
  %s6 = ssub.s32 1, %s4
  %s7 = scalar_select 0, %s6, %s4
  // Predicated region
  $region2: #{noise_remover_forward.7} parent=0 // pred_check
    _
  $region3: #{noise_remover_forward.7} parent=0 // pred_check_branch
    %9 = sbr.rel (0) target = $region5
  $region4: #{noise_remover_forward.7} parent=0 // pred_region
    _
  $region5: #{noise_remover_forward.7} parent=0 // pred_fallthru
    _
  // Predicated region
  $region6: #{noise_remover_forward.7} parent=0 // pred_check
    _
  $region7: #{noise_remover_forward.7} parent=0 // pred_check_branch
    %11 = sbr.rel (0) target = $region9
  $region8: #{noise_remover_forward.7} parent=0 // pred_region
    _
  $region9: #{noise_remover_forward.7} parent=0 // pred_fallthru
    _
  // Predicated region
  $region10: #{noise_remover_forward.7} parent=0 // pred_check
    _
  $region11: #{noise_remover_forward.7} parent=0 // pred_check_branch
    %13 = sbr.rel (0) target = $region13
  $region12: #{noise_remover_forward.7} parent=0 // pred_region
    _
  $region13: #{noise_remover_forward.7} parent=0 // pred_fallthru
    _
  %v14 = vld [vmem:[%s0] sm:$0xff]
  %v15 = vld [vmem:[%s0 + $0x8] sm:$0xff]
  %v16 = vld [vmem:[%s0 + $0x10] sm:$0xff]
  %v17 = vld [vmem:[%s0 + $0x18] sm:$0xff]
  %v18 = vld [vmem:[%s0 + $0x20] sm:$0xff]
  %v19 = vld [vmem:[%s0 + $0x28] sm:$0xff]
  %v20 = vld [vmem:[%s0 + $0x30] sm:$0xff]
  %v21 = vld [vmem:[%s0 + $0x38] sm:$0xff]
  %v22 = vld [vmem:[%s0 + $0x40] sm:$0xff]
  %v23 = vld [vmem:[%s0 + $0x48] sm:$0xff]
  %v24 = vld [vmem:[%s0 + $0x50] sm:$0xff]
  %v25 = vld [vmem:[%s0 + $0x58] sm:$0xff]
  %v26 = vld [vmem:[%s1] sm:$0xff]
  %v27 = vld [vmem:[%s1 + $0x8] sm:$0xff]
  %v28 = vld [vmem:[%s1 + $0x10] sm:$0xff]
  %v29 = vld [vmem:[%s1 + $0x18] sm:$0xff]
  %v30 = vld [vmem:[%s1 + $0x20] sm:$0xff]
  %v31 = vld [vmem:[%s1 + $0x28] sm:$0xff]
  %v32 = vld [vmem:[%s1 + $0x30] sm:$0xff]
  %v33 = vld [vmem:[%s1 + $0x38] sm:$0xff]
  %v34 = vld [vmem:[%s1 + $0x40] sm:$0xff]
  %v35 = vld [vmem:[%s1 + $0x48] sm:$0xff]
  %v36 = vld [vmem:[%s1 + $0x50] sm:$0xff]
  %v37 = vld [vmem:[%s1 + $0x58] sm:$0xff]
  %v38 = vld [vmem:[%s1 + $0x60] sm:$0xff]
  %v39 = vld [vmem:[%s1 + $0x68] sm:$0xff]
  %v40 = vld [vmem:[%s1 + $0x70] sm:$0xff]
  %v41 = vld [vmem:[%s1 + $0x78] sm:$0xff]
  %v42 = vld [vmem:[%s1 + $0x80] sm:$0xff]
  %v43 = vld [vmem:[%s1 + $0x88] sm:$0xff]
  %v44 = vld [vmem:[%s1 + $0x90] sm:$0xff]
  %v45 = vld [vmem:[%s1 + $0x98] sm:$0xff]
  %v46 = vld [vmem:[%s1 + $0xa0] sm:$0xff]
  %v47 = vld [vmem:[%s1 + $0xa8] sm:$0xff]
  %v48 = vld [vmem:[%s1 + $0xb0] sm:$0xff]
  %v49 = vld [vmem:[%s1 + $0xb8] sm:$0xff]
  %v50 = vld [vmem:[%s1 + $0xc0] sm:$0xff]
  %v51 = vld [vmem:[%s1 + $0xc8] sm:$0xff]
  %v52 = vld [vmem:[%s1 + $0xd0] sm:$0xff]
  %v53 = vld [vmem:[%s1 + $0xd8] sm:$0xff]
  %v54 = vld [vmem:[%s1 + $0xe0] sm:$0xff]
  %v55 = vld [vmem:[%s1 + $0xe8] sm:$0xff]
  %v56 = vld [vmem:[%s1 + $0xf0] sm:$0xff]
  %v57 = vld [vmem:[%s1 + $0xf8] sm:$0xff]
  %v58 = vld [vmem:[%s1 + $0x100] sm:$0xff]
  %v59 = vld [vmem:[%s1 + $0x108] sm:$0xff]
  %v60 = vld [vmem:[%s1 + $0x110] sm:$0xff]
  %v61 = vld [vmem:[%s1 + $0x118] sm:$0xff]
  %v62 = vld [vmem:[%s1 + $0x120] sm:$0xff]
  %v63 = vld [vmem:[%s1 + $0x128] sm:$0xff]
  %v64 = vld [vmem:[%s1 + $0x130] sm:$0xff]
  %v65 = vld [vmem:[%s1 + $0x138] sm:$0xff]
  %v66 = vld [vmem:[%s2] sm:$0x1]
  %v68 = vperm.slane %v66, 0
  %vm70 = vcmask 523264
  %v72 = vsel %vm70, %v16, 0
  %v75 = vsel %vm70, %v19, 0
  %v78 = vsel %vm70, %v22, 0
  %v81 = vsel %vm70, %v25, 0
  %83 = vmatpush.msra.mxu0 %v41
  %84 = vmatpush.msra.mxu0 %v40
  %85 = vmatpush.msra.mxu0 %v39
  %86 = vmatpush.msra.mxu0 %v38
  %87 = vmatpush.msra.mxu0 %v37
  %88 = vmatpush.msra.mxu0 %v36
  %89 = vmatpush.msra.mxu0 %v35
  %90 = vmatpush.msra.mxu0 %v34
  %91 = vmatpush.msra.mxu0 %v33
  %92 = vmatpush.msra.mxu0 %v32
  %93 = vmatpush.msra.mxu0 %v31
  %94 = vmatpush.msra.mxu0 %v30
  %95 = vmatpush.msra.mxu0 %v29
  %96 = vmatpush.msra.mxu0 %v28
  %97 = vmatpush.msra.mxu0 %v27
  %98 = vmatpush.msra.mxu0 %v26
  %99 = vmatmul.f32.gmra.mxu0 %v14
  %v100 = vpop.f32.mrf.mxu0
  %v101 = vadd.f32 %v68, %v100
  %102 = vmatmul.f32.gmra.mxu0 %v17
  %v103 = vpop.f32.mrf.mxu0
  %v104 = vadd.f32 %v68, %v103
  %105 = vmatmul.f32.gmra.mxu0 %v20
  %v106 = vpop.f32.mrf.mxu0
  %v107 = vadd.f32 %v68, %v106
  %108 = vmatmul.f32.gmra.mxu0 %v23
  %v109 = vpop.f32.mrf.mxu0
  %v110 = vadd.f32 %v68, %v109
  %111 = vdwg.mxu0
  %112 = vmatpush.msra.mxu0 %v57
  %113 = vmatpush.msra.mxu0 %v56
  %114 = vmatpush.msra.mxu0 %v55
  %115 = vmatpush.msra.mxu0 %v54
  %116 = vmatpush.msra.mxu0 %v53
  %117 = vmatpush.msra.mxu0 %v52
  %118 = vmatpush.msra.mxu0 %v51
  %119 = vmatpush.msra.mxu0 %v50
  %120 = vmatpush.msra.mxu0 %v49
  %121 = vmatpush.msra.mxu0 %v48
  %122 = vmatpush.msra.mxu0 %v47
  %123 = vmatpush.msra.mxu0 %v46
  %124 = vmatpush.msra.mxu0 %v45
  %125 = vmatpush.msra.mxu0 %v44
  %126 = vmatpush.msra.mxu0 %v43
  %127 = vmatpush.msra.mxu0 %v42
  %128 = vmatmul.f32.gmra.mxu0 %v15
  %v129 = vpop.f32.mrf.mxu0
  %v130 = vadd.f32 %v101, %v129
  %131 = vmatmul.f32.gmra.mxu0 %v18
  %v132 = vpop.f32.mrf.mxu0
  %v133 = vadd.f32 %v104, %v132
  %134 = vmatmul.f32.gmra.mxu0 %v21
  %v135 = vpop.f32.mrf.mxu0
  %v136 = vadd.f32 %v107, %v135
  %137 = vmatmul.f32.gmra.mxu0 %v24
  %v138 = vpop.f32.mrf.mxu0
  %v139 = vadd.f32 %v110, %v138
  %140 = vdwg.mxu0
  %141 = vmatpush.msra.mxu0 0.0
  %142 = vmatpush.msra.mxu0 0.0
  %143 = vmatpush.msra.mxu0 0.0
  %144 = vmatpush.msra.mxu0 0.0
  %145 = vmatpush.msra.mxu0 0.0
  %146 = vmatpush.msra.mxu0 0.0
  %147 = vmatpush.msra.mxu0 0.0
  %148 = vmatpush.msra.mxu0 0.0
  %149 = vmatpush.msra.mxu0 %v65
  %150 = vmatpush.msra.mxu0 %v64
  %151 = vmatpush.msra.mxu0 %v63
  %152 = vmatpush.msra.mxu0 %v62
  %153 = vmatpush.msra.mxu0 %v61
  %154 = vmatpush.msra.mxu0 %v60
  %155 = vmatpush.msra.mxu0 %v59
  %156 = vmatpush.msra.mxu0 %v58
  %157 = vmatmul.f32.gmra.mxu0 %v72
  %v158 = vpop.f32.mrf.mxu0
  %v159 = vadd.f32 %v130, %v158
  %160 = vmatmul.f32.gmra.mxu0 %v75
  %v161 = vpop.f32.mrf.mxu0
  %v162 = vadd.f32 %v133, %v161
  %163 = vmatmul.f32.gmra.mxu0 %v78
  %v164 = vpop.f32.mrf.mxu0
  %v165 = vadd.f32 %v136, %v164
  %166 = vmatmul.f32.gmra.mxu0 %v81
  %v167 = vpop.f32.mrf.mxu0
  %v168 = vadd.f32 %v139, %v167
  %169 = vdwg.mxu0
  %170 = vst [vmem:[%s3] sm:$0xff] %v159
  %171 = vst [vmem:[%s3 + $0x8] sm:$0xff] %v162
  %172 = vst [vmem:[%s3 + $0x10] sm:$0xff] %v165
  %173 = vst [vmem:[%s3 + $0x18] sm:$0xff] %v168
  // Predicated region
  $region14: #{noise_remover_forward.7} parent=0 // pred_check
    _
  $region15: #{noise_remover_forward.7} parent=0 // pred_check_branch
    %175 = sbr.rel (0) target = $region17
  $region16: #{noise_remover_forward.7} parent=0 // pred_region
    _
  $region17: #{noise_remover_forward.7} parent=0 // pred_fallthru
    _
  // Predicated region
  $region18: #{noise_remover_forward.7} parent=0 // pred_check
    _
  $region19: #{noise_remover_forward.7} parent=0 // pred_check_branch
    %177 = sbr.rel (0) target = $region21
  $region20: #{noise_remover_forward.7} parent=0 // pred_region
    _
  $region21: #{noise_remover_forward.7} parent=0 // pred_fallthru
    _

// kernel: noise_remover_forward.6
$region0: #{noise_remover_forward.6}
  #allocation0 [shape = 'u32[]', space=smem, size = 0x4, offset = 0x4, fixed_abs, tag = 'smem constant byte address 0x4 - core index']
  #allocation1 [shape = 'u32[72,128]{1,0:T(1,128)}', space=vmem, size = 0x9000, scoped, tag = 'internal scratch']
  %s0 = inlined_call_operand.vmem [shape: f32[64,5], index: 0, kind: input, shape index: {}]
  %s1 = inlined_call_operand.vmem [shape: f32[5,64], index: 1, kind: input, shape index: {}]
  %s2 = inlined_call_operand.vmem [shape: f32[1,64], index: 2, kind: input, shape index: {}]
  %s3 = inlined_call_operand.vmem [shape: f32[64,64], index: 3, kind: output, shape index: {}]
  %s4 = sld [smem:[#allocation0]]
  $region22: #{noise_remover_forward.6} parent=0
    _
  %s6 = ssub.s32 1, %s4
  %s7 = scalar_select 0, %s6, %s4
  // Predicated region
  $region2: #{noise_remover_forward.6} parent=0 // pred_check
    _
  $region3: #{noise_remover_forward.6} parent=0 // pred_check_branch
    %9 = sbr.rel (0) target = $region5
  $region4: #{noise_remover_forward.6} parent=0 // pred_region
    _
  $region5: #{noise_remover_forward.6} parent=0 // pred_fallthru
    _
  // Predicated region
  $region6: #{noise_remover_forward.6} parent=0 // pred_check
    _
  $region7: #{noise_remover_forward.6} parent=0 // pred_check_branch
    %11 = sbr.rel (0) target = $region9
  $region8: #{noise_remover_forward.6} parent=0 // pred_region
    _
  $region9: #{noise_remover_forward.6} parent=0 // pred_fallthru
    _
  // Predicated region
  $region10: #{noise_remover_forward.6} parent=0 // pred_check
    _
  $region11: #{noise_remover_forward.6} parent=0 // pred_check_branch
    %13 = sbr.rel (0) target = $region13
  $region12: #{noise_remover_forward.6} parent=0 // pred_region
    _
  $region13: #{noise_remover_forward.6} parent=0 // pred_fallthru
    _
  %v14 = vld [vmem:[%s0] sm:$0xff]
  %v15 = vld [vmem:[%s0 + $0x8] sm:$0xff]
  %v16 = vld [vmem:[%s0 + $0x10] sm:$0xff]
  %v17 = vld [vmem:[%s0 + $0x18] sm:$0xff]
  %v18 = vld [vmem:[%s0 + $0x20] sm:$0xff]
  %v19 = vld [vmem:[%s0 + $0x28] sm:$0xff]
  %v20 = vld [vmem:[%s0 + $0x30] sm:$0xff]
  %v21 = vld [vmem:[%s0 + $0x38] sm:$0xff]
  %v22 = vld [vmem:[%s1] sm:$0x1f]
  %v23 = vld [vmem:[%s2] sm:$0x1]
  %v25 = vperm.slane %v23, 0
  %vm27 = vcmask 39936
  %v29 = vsel %vm27, %v14, 0
  %v32 = vsel %vm27, %v15, 0
  %v35 = vsel %vm27, %v16, 0
  %v38 = vsel %vm27, %v17, 0
  %v41 = vsel %vm27, %v18, 0
  %v44 = vsel %vm27, %v19, 0
  %v47 = vsel %vm27, %v20, 0
  %v50 = vsel %vm27, %v21, 0
  %vm52 = vcmask 1044480
  %v54 = vsel %vm52, %v22, 0
  %56 = vmatpush.msra.mxu0 0.0
  %57 = vmatpush.msra.mxu0 0.0
  %58 = vmatpush.msra.mxu0 0.0
  %59 = vmatpush.msra.mxu0 0.0
  %60 = vmatpush.msra.mxu0 0.0
  %61 = vmatpush.msra.mxu0 0.0
  %62 = vmatpush.msra.mxu0 0.0
  %63 = vmatpush.msra.mxu0 0.0
  %64 = vmatpush.msra.mxu0 0.0
  %65 = vmatpush.msra.mxu0 0.0
  %66 = vmatpush.msra.mxu0 0.0
  %67 = vmatpush.msra.mxu0 0.0
  %68 = vmatpush.msra.mxu0 0.0
  %69 = vmatpush.msra.mxu0 0.0
  %70 = vmatpush.msra.mxu0 0.0
  %71 = vmatpush.msra.mxu0 %v54
  %72 = vmatmul.f32.gmra.mxu0 %v29
  %v73 = vpop.f32.mrf.mxu0
  %v74 = vadd.f32 %v25, %v73
  %75 = vmatmul.f32.gmra.mxu0 %v32
  %v76 = vpop.f32.mrf.mxu0
  %v77 = vadd.f32 %v25, %v76
  %78 = vmatmul.f32.gmra.mxu0 %v35
  %v79 = vpop.f32.mrf.mxu0
  %v80 = vadd.f32 %v25, %v79
  %81 = vmatmul.f32.gmra.mxu0 %v38
  %v82 = vpop.f32.mrf.mxu0
  %v83 = vadd.f32 %v25, %v82
  %84 = vmatmul.f32.gmra.mxu0 %v41
  %v85 = vpop.f32.mrf.mxu0
  %v86 = vadd.f32 %v25, %v85
  %87 = vmatmul.f32.gmra.mxu0 %v44
  %v88 = vpop.f32.mrf.mxu0
  %v89 = vadd.f32 %v25, %v88
  %90 = vmatmul.f32.gmra.mxu0 %v47
  %v91 = vpop.f32.mrf.mxu0
  %v92 = vadd.f32 %v25, %v91
  %93 = vmatmul.f32.gmra.mxu0 %v50
  %v94 = vpop.f32.mrf.mxu0
  %v95 = vadd.f32 %v25, %v94
  %96 = vdwg.mxu0
  %vm97 = vcmask 523264
  %98 = vst.msk [vmem:[%s3] sm:$0xff] %vm97, %v74
  %99 = vst.msk [vmem:[%s3 + $0x8] sm:$0xff] %vm97, %v77
  %100 = vst.msk [vmem:[%s3 + $0x10] sm:$0xff] %vm97, %v80
  %101 = vst.msk [vmem:[%s3 + $0x18] sm:$0xff] %vm97, %v83
  %102 = vst.msk [vmem:[%s3 + $0x20] sm:$0xff] %vm97, %v86
  %103 = vst.msk [vmem:[%s3 + $0x28] sm:$0xff] %vm97, %v89
  %104 = vst.msk [vmem:[%s3 + $0x30] sm:$0xff] %vm97, %v92
  %105 = vst.msk [vmem:[%s3 + $0x38] sm:$0xff] %vm97, %v95
  // Predicated region
  $region14: #{noise_remover_forward.6} parent=0 // pred_check
    _
  $region15: #{noise_remover_forward.6} parent=0 // pred_check_branch
    %107 = sbr.rel (0) target = $region17
  $region16: #{noise_remover_forward.6} parent=0 // pred_region
    _
  $region17: #{noise_remover_forward.6} parent=0 // pred_fallthru
    _
  // Predicated region
  $region18: #{noise_remover_forward.6} parent=0 // pred_check
    _
  $region19: #{noise_remover_forward.6} parent=0 // pred_check_branch
    %109 = sbr.rel (0) target = $region21
  $region20: #{noise_remover_forward.6} parent=0 // pred_region
    _
  $region21: #{noise_remover_forward.6} parent=0 // pred_fallthru
    _

// kernel: noise_remover_forward.8
$region0: #{noise_remover_forward.8}
  #allocation0 [shape = 'u32[]', space=smem, size = 0x4, offset = 0x4, fixed_abs, tag = 'smem constant byte address 0x4 - core index']
  #allocation1 [shape = 'u32[72,128]{1,0:T(1,128)}', space=vmem, size = 0x9000, scoped, tag = 'internal scratch']
  %s0 = inlined_call_operand.vmem [shape: f32[16,640], index: 0, kind: input, shape index: {}]
  %s1 = inlined_call_operand.vmem [shape: f32[640,256], index: 1, kind: input, shape index: {}]
  %s2 = inlined_call_operand.vmem [shape: f32[1,256], index: 2, kind: input, shape index: {}]
  %s3 = inlined_call_operand.vmem [shape: f32[16,256], index: 3, kind: output, shape index: {}]
  %s4 = sld [smem:[#allocation0]]
  $region22: #{noise_remover_forward.8} parent=0
    _
  %s6 = ssub.s32 1, %s4
  %s7 = scalar_select 0, %s6, %s4
  // Predicated region
  $region2: #{noise_remover_forward.8} parent=0 // pred_check
    _
  $region3: #{noise_remover_forward.8} parent=0 // pred_check_branch
    %9 = sbr.rel (0) target = $region5
  $region4: #{noise_remover_forward.8} parent=0 // pred_region
    _
  $region5: #{noise_remover_forward.8} parent=0 // pred_fallthru
    _
  // Predicated region
  $region6: #{noise_remover_forward.8} parent=0 // pred_check
    _
  $region7: #{noise_remover_forward.8} parent=0 // pred_check_branch
    %11 = sbr.rel (0) target = $region9
  $region8: #{noise_remover_forward.8} parent=0 // pred_region
    _
  $region9: #{noise_remover_forward.8} parent=0 // pred_fallthru
    _
  // Predicated region
  $region10: #{noise_remover_forward.8} parent=0 // pred_check
    _
  $region11: #{noise_remover_forward.8} parent=0 // pred_check_branch
    %13 = sbr.rel (0) target = $region13
  $region12: #{noise_remover_forward.8} parent=0 // pred_region
    _
  $region13: #{noise_remover_forward.8} parent=0 // pred_fallthru
    _
  %v14 = vld [vmem:[%s0] sm:$0xff]
  %v15 = vld [vmem:[%s0 + $0x8] sm:$0xff]
  %v16 = vld [vmem:[%s0 + $0x10] sm:$0xff]
  %v17 = vld [vmem:[%s0 + $0x18] sm:$0xff]
  %v18 = vld [vmem:[%s0 + $0x20] sm:$0xff]
  %v19 = vld [vmem:[%s0 + $0x28] sm:$0xff]
  %v20 = vld [vmem:[%s0 + $0x30] sm:$0xff]
  %v21 = vld [vmem:[%s0 + $0x38] sm:$0xff]
  %v22 = vld [vmem:[%s0 + $0x40] sm:$0xff]
  %v23 = vld [vmem:[%s0 + $0x48] sm:$0xff]
  %v24 = vld [vmem:[%s1] sm:$0xff]
  %v25 = vld [vmem:[%s1 + $0x8] sm:$0xff]
  %v26 = vld [vmem:[%s1 + $0x10] sm:$0xff]
  %v27 = vld [vmem:[%s1 + $0x18] sm:$0xff]
  %v28 = vld [vmem:[%s1 + $0x20] sm:$0xff]
  %v29 = vld [vmem:[%s1 + $0x28] sm:$0xff]
  %v30 = vld [vmem:[%s1 + $0x30] sm:$0xff]
  %v31 = vld [vmem:[%s1 + $0x38] sm:$0xff]
  %v32 = vld [vmem:[%s1 + $0x40] sm:$0xff]
  %v33 = vld [vmem:[%s1 + $0x48] sm:$0xff]
  %v34 = vld [vmem:[%s1 + $0x50] sm:$0xff]
  %v35 = vld [vmem:[%s1 + $0x58] sm:$0xff]
  %v36 = vld [vmem:[%s1 + $0x60] sm:$0xff]
  %v37 = vld [vmem:[%s1 + $0x68] sm:$0xff]
  %v38 = vld [vmem:[%s1 + $0x70] sm:$0xff]
  %v39 = vld [vmem:[%s1 + $0x78] sm:$0xff]
  %v40 = vld [vmem:[%s1 + $0x80] sm:$0xff]
  %v41 = vld [vmem:[%s1 + $0x88] sm:$0xff]
  %v42 = vld [vmem:[%s1 + $0x90] sm:$0xff]
  %v43 = vld [vmem:[%s1 + $0x98] sm:$0xff]
  %v44 = vld [vmem:[%s1 + $0xa0] sm:$0xff]
  %v45 = vld [vmem:[%s1 + $0xa8] sm:$0xff]
  %v46 = vld [vmem:[%s1 + $0xb0] sm:$0xff]
  %v47 = vld [vmem:[%s1 + $0xb8] sm:$0xff]
  %v48 = vld [vmem:[%s1 + $0xc0] sm:$0xff]
  %v49 = vld [vmem:[%s1 + $0xc8] sm:$0xff]
  %v50 = vld [vmem:[%s1 + $0xd0] sm:$0xff]
  %v51 = vld [vmem:[%s1 + $0xd8] sm:$0xff]
  %v52 = vld [vmem:[%s1 + $0xe0] sm:$0xff]
  %v53 = vld [vmem:[%s1 + $0xe8] sm:$0xff]
  %v54 = vld [vmem:[%s1 + $0xf0] sm:$0xff]
  %v55 = vld [vmem:[%s1 + $0xf8] sm:$0xff]
  %v56 = vld [vmem:[%s1 + $0x100] sm:$0xff]
  %v57 = vld [vmem:[%s1 + $0x108] sm:$0xff]
  %v58 = vld [vmem:[%s1 + $0x110] sm:$0xff]
  %v59 = vld [vmem:[%s1 + $0x118] sm:$0xff]
  %v60 = vld [vmem:[%s1 + $0x120] sm:$0xff]
  %v61 = vld [vmem:[%s1 + $0x128] sm:$0xff]
  %v62 = vld [vmem:[%s1 + $0x130] sm:$0xff]
  %v63 = vld [vmem:[%s1 + $0x138] sm:$0xff]
  %v64 = vld [vmem:[%s1 + $0x140] sm:$0xff]
  %v65 = vld [vmem:[%s1 + $0x148] sm:$0xff]
  %v66 = vld [vmem:[%s1 + $0x150] sm:$0xff]
  %v67 = vld [vmem:[%s1 + $0x158] sm:$0xff]
  %v68 = vld [vmem:[%s1 + $0x160] sm:$0xff]
  %v69 = vld [vmem:[%s1 + $0x168] sm:$0xff]
  %v70 = vld [vmem:[%s1 + $0x170] sm:$0xff]
  %v71 = vld [vmem:[%s1 + $0x178] sm:$0xff]
  %v72 = vld [vmem:[%s1 + $0x180] sm:$0xff]
  %v73 = vld [vmem:[%s1 + $0x188] sm:$0xff]
  %v74 = vld [vmem:[%s1 + $0x190] sm:$0xff]
  %v75 = vld [vmem:[%s1 + $0x198] sm:$0xff]
  %v76 = vld [vmem:[%s1 + $0x1a0] sm:$0xff]
  %v77 = vld [vmem:[%s1 + $0x1a8] sm:$0xff]
  %v78 = vld [vmem:[%s1 + $0x1b0] sm:$0xff]
  %v79 = vld [vmem:[%s1 + $0x1b8] sm:$0xff]
  %v80 = vld [vmem:[%s1 + $0x1c0] sm:$0xff]
  %v81 = vld [vmem:[%s1 + $0x1c8] sm:$0xff]
  %v82 = vld [vmem:[%s1 + $0x1d0] sm:$0xff]
  %v83 = vld [vmem:[%s1 + $0x1d8] sm:$0xff]
  %v84 = vld [vmem:[%s1 + $0x1e0] sm:$0xff]
  %v85 = vld [vmem:[%s1 + $0x1e8] sm:$0xff]
  %v86 = vld [vmem:[%s1 + $0x1f0] sm:$0xff]
  %v87 = vld [vmem:[%s1 + $0x1f8] sm:$0xff]
  %v88 = vld [vmem:[%s1 + $0x200] sm:$0xff]
  %v89 = vld [vmem:[%s1 + $0x208] sm:$0xff]
  %v90 = vld [vmem:[%s1 + $0x210] sm:$0xff]
  %v91 = vld [vmem:[%s1 + $0x218] sm:$0xff]
  %v92 = vld [vmem:[%s1 + $0x220] sm:$0xff]
  %v93 = vld [vmem:[%s1 + $0x228] sm:$0xff]
  %v94 = vld [vmem:[%s1 + $0x230] sm:$0xff]
  %v95 = vld [vmem:[%s1 + $0x238] sm:$0xff]
  %v96 = vld [vmem:[%s1 + $0x240] sm:$0xff]
  %v97 = vld [vmem:[%s1 + $0x248] sm:$0xff]
  %v98 = vld [vmem:[%s1 + $0x250] sm:$0xff]
  %v99 = vld [vmem:[%s1 + $0x258] sm:$0xff]
  %v100 = vld [vmem:[%s1 + $0x260] sm:$0xff]
  %v101 = vld [vmem:[%s1 + $0x268] sm:$0xff]
  %v102 = vld [vmem:[%s1 + $0x270] sm:$0xff]
  %v103 = vld [vmem:[%s1 + $0x278] sm:$0xff]
  %v104 = vld [vmem:[%s1 + $0x280] sm:$0xff]
  %v105 = vld [vmem:[%s1 + $0x288] sm:$0xff]
  %v106 = vld [vmem:[%s1 + $0x290] sm:$0xff]
  %v107 = vld [vmem:[%s1 + $0x298] sm:$0xff]
  %v108 = vld [vmem:[%s1 + $0x2a0] sm:$0xff]
  %v109 = vld [vmem:[%s1 + $0x2a8] sm:$0xff]
  %v110 = vld [vmem:[%s1 + $0x2b0] sm:$0xff]
  %v111 = vld [vmem:[%s1 + $0x2b8] sm:$0xff]
  %v112 = vld [vmem:[%s1 + $0x2c0] sm:$0xff]
  %v113 = vld [vmem:[%s1 + $0x2c8] sm:$0xff]
  %v114 = vld [vmem:[%s1 + $0x2d0] sm:$0xff]
  %v115 = vld [vmem:[%s1 + $0x2d8] sm:$0xff]
  %v116 = vld [vmem:[%s1 + $0x2e0] sm:$0xff]
  %v117 = vld [vmem:[%s1 + $0x2e8] sm:$0xff]
  %v118 = vld [vmem:[%s1 + $0x2f0] sm:$0xff]
  %v119 = vld [vmem:[%s1 + $0x2f8] sm:$0xff]
  %v120 = vld [vmem:[%s1 + $0x300] sm:$0xff]
  %v121 = vld [vmem:[%s1 + $0x308] sm:$0xff]
  %v122 = vld [vmem:[%s1 + $0x310] sm:$0xff]
  %v123 = vld [vmem:[%s1 + $0x318] sm:$0xff]
  %v124 = vld [vmem:[%s1 + $0x320] sm:$0xff]
  %v125 = vld [vmem:[%s1 + $0x328] sm:$0xff]
  %v126 = vld [vmem:[%s1 + $0x330] sm:$0xff]
  %v127 = vld [vmem:[%s1 + $0x338] sm:$0xff]
  %v128 = vld [vmem:[%s1 + $0x340] sm:$0xff]
  %v129 = vld [vmem:[%s1 + $0x348] sm:$0xff]
  %v130 = vld [vmem:[%s1 + $0x350] sm:$0xff]
  %v131 = vld [vmem:[%s1 + $0x358] sm:$0xff]
  %v132 = vld [vmem:[%s1 + $0x360] sm:$0xff]
  %v133 = vld [vmem:[%s1 + $0x368] sm:$0xff]
  %v134 = vld [vmem:[%s1 + $0x370] sm:$0xff]
  %v135 = vld [vmem:[%s1 + $0x378] sm:$0xff]
  %v136 = vld [vmem:[%s1 + $0x380] sm:$0xff]
  %v137 = vld [vmem:[%s1 + $0x388] sm:$0xff]
  %v138 = vld [vmem:[%s1 + $0x390] sm:$0xff]
  %v139 = vld [vmem:[%s1 + $0x398] sm:$0xff]
  %v140 = vld [vmem:[%s1 + $0x3a0] sm:$0xff]
  %v141 = vld [vmem:[%s1 + $0x3a8] sm:$0xff]
  %v142 = vld [vmem:[%s1 + $0x3b0] sm:$0xff]
  %v143 = vld [vmem:[%s1 + $0x3b8] sm:$0xff]
  %v144 = vld [vmem:[%s1 + $0x3c0] sm:$0xff]
  %v145 = vld [vmem:[%s1 + $0x3c8] sm:$0xff]
  %v146 = vld [vmem:[%s1 + $0x3d0] sm:$0xff]
  %v147 = vld [vmem:[%s1 + $0x3d8] sm:$0xff]
  %v148 = vld [vmem:[%s1 + $0x3e0] sm:$0xff]
  %v149 = vld [vmem:[%s1 + $0x3e8] sm:$0xff]
  %v150 = vld [vmem:[%s1 + $0x3f0] sm:$0xff]
  %v151 = vld [vmem:[%s1 + $0x3f8] sm:$0xff]
  %v152 = vld [vmem:[%s1 + $0x400] sm:$0xff]
  %v153 = vld [vmem:[%s1 + $0x408] sm:$0xff]
  %v154 = vld [vmem:[%s1 + $0x410] sm:$0xff]
  %v155 = vld [vmem:[%s1 + $0x418] sm:$0xff]
  %v156 = vld [vmem:[%s1 + $0x420] sm:$0xff]
  %v157 = vld [vmem:[%s1 + $0x428] sm:$0xff]
  %v158 = vld [vmem:[%s1 + $0x430] sm:$0xff]
  %v159 = vld [vmem:[%s1 + $0x438] sm:$0xff]
  %v160 = vld [vmem:[%s1 + $0x440] sm:$0xff]
  %v161 = vld [vmem:[%s1 + $0x448] sm:$0xff]
  %v162 = vld [vmem:[%s1 + $0x450] sm:$0xff]
  %v163 = vld [vmem:[%s1 + $0x458] sm:$0xff]
  %v164 = vld [vmem:[%s1 + $0x460] sm:$0xff]
  %v165 = vld [vmem:[%s1 + $0x468] sm:$0xff]
  %v166 = vld [vmem:[%s1 + $0x470] sm:$0xff]
  %v167 = vld [vmem:[%s1 + $0x478] sm:$0xff]
  %v168 = vld [vmem:[%s1 + $0x480] sm:$0xff]
  %v169 = vld [vmem:[%s1 + $0x488] sm:$0xff]
  %v170 = vld [vmem:[%s1 + $0x490] sm:$0xff]
  %v171 = vld [vmem:[%s1 + $0x498] sm:$0xff]
  %v172 = vld [vmem:[%s1 + $0x4a0] sm:$0xff]
  %v173 = vld [vmem:[%s1 + $0x4a8] sm:$0xff]
  %v174 = vld [vmem:[%s1 + $0x4b0] sm:$0xff]
  %v175 = vld [vmem:[%s1 + $0x4b8] sm:$0xff]
  %v176 = vld [vmem:[%s1 + $0x4c0] sm:$0xff]
  %v177 = vld [vmem:[%s1 + $0x4c8] sm:$0xff]
  %v178 = vld [vmem:[%s1 + $0x4d0] sm:$0xff]
  %v179 = vld [vmem:[%s1 + $0x4d8] sm:$0xff]
  %v180 = vld [vmem:[%s1 + $0x4e0] sm:$0xff]
  %v181 = vld [vmem:[%s1 + $0x4e8] sm:$0xff]
  %v182 = vld [vmem:[%s1 + $0x4f0] sm:$0xff]
  %v183 = vld [vmem:[%s1 + $0x4f8] sm:$0xff]
  %v184 = vld [vmem:[%s2] sm:$0x3]
  %v186 = vperm.slane %v184, 0
  %v187 = vperm.slane %v184, 1
  %190 = vmatpush.msra.mxu0 %v54
  %191 = vmatpush.msra.mxu0 %v52
  %192 = vmatpush.msra.mxu0 %v50
  %193 = vmatpush.msra.mxu0 %v48
  %194 = vmatpush.msra.mxu0 %v46
  %195 = vmatpush.msra.mxu0 %v44
  %196 = vmatpush.msra.mxu0 %v42
  %197 = vmatpush.msra.mxu0 %v40
  %198 = vmatpush.msra.mxu0 %v38
  %199 = vmatpush.msra.mxu0 %v36
  %200 = vmatpush.msra.mxu0 %v34
  %201 = vmatpush.msra.mxu0 %v32
  %202 = vmatpush.msra.mxu0 %v30
  %203 = vmatpush.msra.mxu0 %v28
  %204 = vmatpush.msra.mxu0 %v26
  %205 = vmatpush.msra.mxu0 %v24
  %206 = vmatmul.f32.gmra.mxu0 %v14
  %v207 = vpop.f32.mrf.mxu0
  %v208 = vadd.f32 %v186, %v207
  %209 = vmatmul.f32.gmra.mxu0 %v19
  %v210 = vpop.f32.mrf.mxu0
  %v211 = vadd.f32 %v186, %v210
  %212 = vdwg.mxu0
  %213 = vmatpush.msra.mxu0 %v86
  %214 = vmatpush.msra.mxu0 %v84
  %215 = vmatpush.msra.mxu0 %v82
  %216 = vmatpush.msra.mxu0 %v80
  %217 = vmatpush.msra.mxu0 %v78
  %218 = vmatpush.msra.mxu0 %v76
  %219 = vmatpush.msra.mxu0 %v74
  %220 = vmatpush.msra.mxu0 %v72
  %221 = vmatpush.msra.mxu0 %v70
  %222 = vmatpush.msra.mxu0 %v68
  %223 = vmatpush.msra.mxu0 %v66
  %224 = vmatpush.msra.mxu0 %v64
  %225 = vmatpush.msra.mxu0 %v62
  %226 = vmatpush.msra.mxu0 %v60
  %227 = vmatpush.msra.mxu0 %v58
  %228 = vmatpush.msra.mxu0 %v56
  %229 = vmatmul.f32.gmra.mxu0 %v15
  %v230 = vpop.f32.mrf.mxu0
  %v231 = vadd.f32 %v208, %v230
  %232 = vmatmul.f32.gmra.mxu0 %v20
  %v233 = vpop.f32.mrf.mxu0
  %v234 = vadd.f32 %v211, %v233
  %235 = vdwg.mxu0
  %236 = vmatpush.msra.mxu0 %v118
  %237 = vmatpush.msra.mxu0 %v116
  %238 = vmatpush.msra.mxu0 %v114
  %239 = vmatpush.msra.mxu0 %v112
  %240 = vmatpush.msra.mxu0 %v110
  %241 = vmatpush.msra.mxu0 %v108
  %242 = vmatpush.msra.mxu0 %v106
  %243 = vmatpush.msra.mxu0 %v104
  %244 = vmatpush.msra.mxu0 %v102
  %245 = vmatpush.msra.mxu0 %v100
  %246 = vmatpush.msra.mxu0 %v98
  %247 = vmatpush.msra.mxu0 %v96
  %248 = vmatpush.msra.mxu0 %v94
  %249 = vmatpush.msra.mxu0 %v92
  %250 = vmatpush.msra.mxu0 %v90
  %251 = vmatpush.msra.mxu0 %v88
  %252 = vmatmul.f32.gmra.mxu0 %v16
  %v253 = vpop.f32.mrf.mxu0
  %v254 = vadd.f32 %v231, %v253
  %255 = vmatmul.f32.gmra.mxu0 %v21
  %v256 = vpop.f32.mrf.mxu0
  %v257 = vadd.f32 %v234, %v256
  %258 = vdwg.mxu0
  %259 = vmatpush.msra.mxu0 %v150
  %260 = vmatpush.msra.mxu0 %v148
  %261 = vmatpush.msra.mxu0 %v146
  %262 = vmatpush.msra.mxu0 %v144
  %263 = vmatpush.msra.mxu0 %v142
  %264 = vmatpush.msra.mxu0 %v140
  %265 = vmatpush.msra.mxu0 %v138
  %266 = vmatpush.msra.mxu0 %v136
  %267 = vmatpush.msra.mxu0 %v134
  %268 = vmatpush.msra.mxu0 %v132
  %269 = vmatpush.msra.mxu0 %v130
  %270 = vmatpush.msra.mxu0 %v128
  %271 = vmatpush.msra.mxu0 %v126
  %272 = vmatpush.msra.mxu0 %v124
  %273 = vmatpush.msra.mxu0 %v122
  %274 = vmatpush.msra.mxu0 %v120
  %275 = vmatmul.f32.gmra.mxu0 %v17
  %v276 = vpop.f32.mrf.mxu0
  %v277 = vadd.f32 %v254, %v276
  %278 = vmatmul.f32.gmra.mxu0 %v22
  %v279 = vpop.f32.mrf.mxu0
  %v280 = vadd.f32 %v257, %v279
  %281 = vdwg.mxu0
  %282 = vmatpush.msra.mxu0 %v182
  %283 = vmatpush.msra.mxu0 %v180
  %284 = vmatpush.msra.mxu0 %v178
  %285 = vmatpush.msra.mxu0 %v176
  %286 = vmatpush.msra.mxu0 %v174
  %287 = vmatpush.msra.mxu0 %v172
  %288 = vmatpush.msra.mxu0 %v170
  %289 = vmatpush.msra.mxu0 %v168
  %290 = vmatpush.msra.mxu0 %v166
  %291 = vmatpush.msra.mxu0 %v164
  %292 = vmatpush.msra.mxu0 %v162
  %293 = vmatpush.msra.mxu0 %v160
  %294 = vmatpush.msra.mxu0 %v158
  %295 = vmatpush.msra.mxu0 %v156
  %296 = vmatpush.msra.mxu0 %v154
  %297 = vmatpush.msra.mxu0 %v152
  %298 = vmatmul.f32.gmra.mxu0 %v18
  %v299 = vpop.f32.mrf.mxu0
  %v300 = vadd.f32 %v277, %v299
  %301 = vmatmul.f32.gmra.mxu0 %v23
  %v302 = vpop.f32.mrf.mxu0
  %v303 = vadd.f32 %v280, %v302
  %304 = vdwg.mxu0
  %305 = vmatpush.msra.mxu0 %v55
  %306 = vmatpush.msra.mxu0 %v53
  %307 = vmatpush.msra.mxu0 %v51
  %308 = vmatpush.msra.mxu0 %v49
  %309 = vmatpush.msra.mxu0 %v47
  %310 = vmatpush.msra.mxu0 %v45
  %311 = vmatpush.msra.mxu0 %v43
  %312 = vmatpush.msra.mxu0 %v41
  %313 = vmatpush.msra.mxu0 %v39
  %314 = vmatpush.msra.mxu0 %v37
  %315 = vmatpush.msra.mxu0 %v35
  %316 = vmatpush.msra.mxu0 %v33
  %317 = vmatpush.msra.mxu0 %v31
  %318 = vmatpush.msra.mxu0 %v29
  %319 = vmatpush.msra.mxu0 %v27
  %320 = vmatpush.msra.mxu0 %v25
  %321 = vmatmul.f32.gmra.mxu0 %v14
  %v322 = vpop.f32.mrf.mxu0
  %v323 = vadd.f32 %v187, %v322
  %324 = vmatmul.f32.gmra.mxu0 %v19
  %v325 = vpop.f32.mrf.mxu0
  %v326 = vadd.f32 %v187, %v325
  %327 = vdwg.mxu0
  %328 = vmatpush.msra.mxu0 %v87
  %329 = vmatpush.msra.mxu0 %v85
  %330 = vmatpush.msra.mxu0 %v83
  %331 = vmatpush.msra.mxu0 %v81
  %332 = vmatpush.msra.mxu0 %v79
  %333 = vmatpush.msra.mxu0 %v77
  %334 = vmatpush.msra.mxu0 %v75
  %335 = vmatpush.msra.mxu0 %v73
  %336 = vmatpush.msra.mxu0 %v71
  %337 = vmatpush.msra.mxu0 %v69
  %338 = vmatpush.msra.mxu0 %v67
  %339 = vmatpush.msra.mxu0 %v65
  %340 = vmatpush.msra.mxu0 %v63
  %341 = vmatpush.msra.mxu0 %v61
  %342 = vmatpush.msra.mxu0 %v59
  %343 = vmatpush.msra.mxu0 %v57
  %344 = vmatmul.f32.gmra.mxu0 %v15
  %v345 = vpop.f32.mrf.mxu0
  %v346 = vadd.f32 %v323, %v345
  %347 = vmatmul.f32.gmra.mxu0 %v20
  %v348 = vpop.f32.mrf.mxu0
  %v349 = vadd.f32 %v326, %v348
  %350 = vdwg.mxu0
  %351 = vmatpush.msra.mxu0 %v119
  %352 = vmatpush.msra.mxu0 %v117
  %353 = vmatpush.msra.mxu0 %v115
  %354 = vmatpush.msra.mxu0 %v113
  %355 = vmatpush.msra.mxu0 %v111
  %356 = vmatpush.msra.mxu0 %v109
  %357 = vmatpush.msra.mxu0 %v107
  %358 = vmatpush.msra.mxu0 %v105
  %359 = vmatpush.msra.mxu0 %v103
  %360 = vmatpush.msra.mxu0 %v101
  %361 = vmatpush.msra.mxu0 %v99
  %362 = vmatpush.msra.mxu0 %v97
  %363 = vmatpush.msra.mxu0 %v95
  %364 = vmatpush.msra.mxu0 %v93
  %365 = vmatpush.msra.mxu0 %v91
  %366 = vmatpush.msra.mxu0 %v89
  %367 = vmatmul.f32.gmra.mxu0 %v16
  %v368 = vpop.f32.mrf.mxu0
  %v369 = vadd.f32 %v346, %v368
  %370 = vmatmul.f32.gmra.mxu0 %v21
  %v371 = vpop.f32.mrf.mxu0
  %v372 = vadd.f32 %v349, %v371
  %373 = vdwg.mxu0
  %374 = vmatpush.msra.mxu0 %v151
  %375 = vmatpush.msra.mxu0 %v149
  %376 = vmatpush.msra.mxu0 %v147
  %377 = vmatpush.msra.mxu0 %v145
  %378 = vmatpush.msra.mxu0 %v143
  %379 = vmatpush.msra.mxu0 %v141
  %380 = vmatpush.msra.mxu0 %v139
  %381 = vmatpush.msra.mxu0 %v137
  %382 = vmatpush.msra.mxu0 %v135
  %383 = vmatpush.msra.mxu0 %v133
  %384 = vmatpush.msra.mxu0 %v131
  %385 = vmatpush.msra.mxu0 %v129
  %386 = vmatpush.msra.mxu0 %v127
  %387 = vmatpush.msra.mxu0 %v125
  %388 = vmatpush.msra.mxu0 %v123
  %389 = vmatpush.msra.mxu0 %v121
  %390 = vmatmul.f32.gmra.mxu0 %v17
  %v391 = vpop.f32.mrf.mxu0
  %v392 = vadd.f32 %v369, %v391
  %393 = vmatmul.f32.gmra.mxu0 %v22
  %v394 = vpop.f32.mrf.mxu0
  %v395 = vadd.f32 %v372, %v394
  %396 = vdwg.mxu0
  %397 = vmatpush.msra.mxu0 %v183
  %398 = vmatpush.msra.mxu0 %v181
  %399 = vmatpush.msra.mxu0 %v179
  %400 = vmatpush.msra.mxu0 %v177
  %401 = vmatpush.msra.mxu0 %v175
  %402 = vmatpush.msra.mxu0 %v173
  %403 = vmatpush.msra.mxu0 %v171
  %404 = vmatpush.msra.mxu0 %v169
  %405 = vmatpush.msra.mxu0 %v167
  %406 = vmatpush.msra.mxu0 %v165
  %407 = vmatpush.msra.mxu0 %v163
  %408 = vmatpush.msra.mxu0 %v161
  %409 = vmatpush.msra.mxu0 %v159
  %410 = vmatpush.msra.mxu0 %v157
  %411 = vmatpush.msra.mxu0 %v155
  %412 = vmatpush.msra.mxu0 %v153
  %413 = vmatmul.f32.gmra.mxu0 %v18
  %v414 = vpop.f32.mrf.mxu0
  %v415 = vadd.f32 %v392, %v414
  %416 = vmatmul.f32.gmra.mxu0 %v23
  %v417 = vpop.f32.mrf.mxu0
  %v418 = vadd.f32 %v395, %v417
  %419 = vdwg.mxu0
  %420 = vst [vmem:[%s3] sm:$0xff] %v300
  %421 = vst [vmem:[%s3 + $0x8] sm:$0xff] %v415
  %422 = vst [vmem:[%s3 + $0x10] sm:$0xff] %v303
  %423 = vst [vmem:[%s3 + $0x18] sm:$0xff] %v418
  // Predicated region
  $region14: #{noise_remover_forward.8} parent=0 // pred_check
    _
  $region15: #{noise_remover_forward.8} parent=0 // pred_check_branch
    %425 = sbr.rel (0) target = $region17
  $region16: #{noise_remover_forward.8} parent=0 // pred_region
    _
  $region17: #{noise_remover_forward.8} parent=0 // pred_fallthru
    _
  // Predicated region
  $region18: #{noise_remover_forward.8} parent=0 // pred_check
    _
  $region19: #{noise_remover_forward.8} parent=0 // pred_check_branch
    %427 = sbr.rel (0) target = $region21
  $region20: #{noise_remover_forward.8} parent=0 // pred_region
    _
  $region21: #{noise_remover_forward.8} parent=0 // pred_fallthru
    _

// kernel: noise_remover_forward.9
$region0: #{noise_remover_forward.9}
  #allocation0 [shape = 'u32[]', space=smem, size = 0x4, offset = 0x4, fixed_abs, tag = 'smem constant byte address 0x4 - core index']
  #allocation1 [shape = 'u32[72,128]{1,0:T(1,128)}', space=vmem, size = 0x9000, scoped, tag = 'internal scratch']
  %s0 = inlined_call_operand.vmem [shape: f32[16,768], index: 0, kind: input, shape index: {}]
  %s1 = inlined_call_operand.vmem [shape: f32[768,256], index: 1, kind: input, shape index: {}]
  %s2 = inlined_call_operand.vmem [shape: f32[1,256], index: 2, kind: input, shape index: {}]
  %s3 = inlined_call_operand.vmem [shape: f32[16,256], index: 3, kind: output, shape index: {}]
  %s4 = sld [smem:[#allocation0]]
  $region22: #{noise_remover_forward.9} parent=0
    _
  %s6 = ssub.s32 1, %s4
  %s7 = scalar_select 0, %s6, %s4
  // Predicated region
  $region2: #{noise_remover_forward.9} parent=0 // pred_check
    _
  $region3: #{noise_remover_forward.9} parent=0 // pred_check_branch
    %9 = sbr.rel (0) target = $region5
  $region4: #{noise_remover_forward.9} parent=0 // pred_region
    _
  $region5: #{noise_remover_forward.9} parent=0 // pred_fallthru
    _
  // Predicated region
  $region6: #{noise_remover_forward.9} parent=0 // pred_check
    _
  $region7: #{noise_remover_forward.9} parent=0 // pred_check_branch
    %11 = sbr.rel (0) target = $region9
  $region8: #{noise_remover_forward.9} parent=0 // pred_region
    _
  $region9: #{noise_remover_forward.9} parent=0 // pred_fallthru
    _
  // Predicated region
  $region10: #{noise_remover_forward.9} parent=0 // pred_check
    _
  $region11: #{noise_remover_forward.9} parent=0 // pred_check_branch
    %13 = sbr.rel (0) target = $region13
  $region12: #{noise_remover_forward.9} parent=0 // pred_region
    _
  $region13: #{noise_remover_forward.9} parent=0 // pred_fallthru
    _
  %v14 = vld [vmem:[%s0] sm:$0xff]
  %v15 = vld [vmem:[%s0 + $0x8] sm:$0xff]
  %v16 = vld [vmem:[%s0 + $0x10] sm:$0xff]
  %v17 = vld [vmem:[%s0 + $0x18] sm:$0xff]
  %v18 = vld [vmem:[%s0 + $0x20] sm:$0xff]
  %v19 = vld [vmem:[%s0 + $0x28] sm:$0xff]
  %v20 = vld [vmem:[%s0 + $0x30] sm:$0xff]
  %v21 = vld [vmem:[%s0 + $0x38] sm:$0xff]
  %v22 = vld [vmem:[%s0 + $0x40] sm:$0xff]
  %v23 = vld [vmem:[%s0 + $0x48] sm:$0xff]
  %v24 = vld [vmem:[%s0 + $0x50] sm:$0xff]
  %v25 = vld [vmem:[%s0 + $0x58] sm:$0xff]
  %v26 = vld [vmem:[%s1] sm:$0xff]
  %v27 = vld [vmem:[%s1 + $0x8] sm:$0xff]
  %v28 = vld [vmem:[%s1 + $0x10] sm:$0xff]
  %v29 = vld [vmem:[%s1 + $0x18] sm:$0xff]
  %v30 = vld [vmem:[%s1 + $0x20] sm:$0xff]
  %v31 = vld [vmem:[%s1 + $0x28] sm:$0xff]
  %v32 = vld [vmem:[%s1 + $0x30] sm:$0xff]
  %v33 = vld [vmem:[%s1 + $0x38] sm:$0xff]
  %v34 = vld [vmem:[%s1 + $0x40] sm:$0xff]
  %v35 = vld [vmem:[%s1 + $0x48] sm:$0xff]
  %v36 = vld [vmem:[%s1 + $0x50] sm:$0xff]
  %v37 = vld [vmem:[%s1 + $0x58] sm:$0xff]
  %v38 = vld [vmem:[%s1 + $0x60] sm:$0xff]
  %v39 = vld [vmem:[%s1 + $0x68] sm:$0xff]
  %v40 = vld [vmem:[%s1 + $0x70] sm:$0xff]
  %v41 = vld [vmem:[%s1 + $0x78] sm:$0xff]
  %v42 = vld [vmem:[%s1 + $0x80] sm:$0xff]
  %v43 = vld [vmem:[%s1 + $0x88] sm:$0xff]
  %v44 = vld [vmem:[%s1 + $0x90] sm:$0xff]
  %v45 = vld [vmem:[%s1 + $0x98] sm:$0xff]
  %v46 = vld [vmem:[%s1 + $0xa0] sm:$0xff]
  %v47 = vld [vmem:[%s1 + $0xa8] sm:$0xff]
  %v48 = vld [vmem:[%s1 + $0xb0] sm:$0xff]
  %v49 = vld [vmem:[%s1 + $0xb8] sm:$0xff]
  %v50 = vld [vmem:[%s1 + $0xc0] sm:$0xff]
  %v51 = vld [vmem:[%s1 + $0xc8] sm:$0xff]
  %v52 = vld [vmem:[%s1 + $0xd0] sm:$0xff]
  %v53 = vld [vmem:[%s1 + $0xd8] sm:$0xff]
  %v54 = vld [vmem:[%s1 + $0xe0] sm:$0xff]
  %v55 = vld [vmem:[%s1 + $0xe8] sm:$0xff]
  %v56 = vld [vmem:[%s1 + $0xf0] sm:$0xff]
  %v57 = vld [vmem:[%s1 + $0xf8] sm:$0xff]
  %v58 = vld [vmem:[%s1 + $0x100] sm:$0xff]
  %v59 = vld [vmem:[%s1 + $0x108] sm:$0xff]
  %v60 = vld [vmem:[%s1 + $0x110] sm:$0xff]
  %v61 = vld [vmem:[%s1 + $0x118] sm:$0xff]
  %v62 = vld [vmem:[%s1 + $0x120] sm:$0xff]
  %v63 = vld [vmem:[%s1 + $0x128] sm:$0xff]
  %v64 = vld [vmem:[%s1 + $0x130] sm:$0xff]
  %v65 = vld [vmem:[%s1 + $0x138] sm:$0xff]
  %v66 = vld [vmem:[%s1 + $0x140] sm:$0xff]
  %v67 = vld [vmem:[%s1 + $0x148] sm:$0xff]
  %v68 = vld [vmem:[%s1 + $0x150] sm:$0xff]
  %v69 = vld [vmem:[%s1 + $0x158] sm:$0xff]
  %v70 = vld [vmem:[%s1 + $0x160] sm:$0xff]
  %v71 = vld [vmem:[%s1 + $0x168] sm:$0xff]
  %v72 = vld [vmem:[%s1 + $0x170] sm:$0xff]
  %v73 = vld [vmem:[%s1 + $0x178] sm:$0xff]
  %v74 = vld [vmem:[%s1 + $0x180] sm:$0xff]
  %v75 = vld [vmem:[%s1 + $0x188] sm:$0xff]
  %v76 = vld [vmem:[%s1 + $0x190] sm:$0xff]
  %v77 = vld [vmem:[%s1 + $0x198] sm:$0xff]
  %v78 = vld [vmem:[%s1 + $0x1a0] sm:$0xff]
  %v79 = vld [vmem:[%s1 + $0x1a8] sm:$0xff]
  %v80 = vld [vmem:[%s1 + $0x1b0] sm:$0xff]
  %v81 = vld [vmem:[%s1 + $0x1b8] sm:$0xff]
  %v82 = vld [vmem:[%s1 + $0x1c0] sm:$0xff]
  %v83 = vld [vmem:[%s1 + $0x1c8] sm:$0xff]
  %v84 = vld [vmem:[%s1 + $0x1d0] sm:$0xff]
  %v85 = vld [vmem:[%s1 + $0x1d8] sm:$0xff]
  %v86 = vld [vmem:[%s1 + $0x1e0] sm:$0xff]
  %v87 = vld [vmem:[%s1 + $0x1e8] sm:$0xff]
  %v88 = vld [vmem:[%s1 + $0x1f0] sm:$0xff]
  %v89 = vld [vmem:[%s1 + $0x1f8] sm:$0xff]
  %v90 = vld [vmem:[%s1 + $0x200] sm:$0xff]
  %v91 = vld [vmem:[%s1 + $0x208] sm:$0xff]
  %v92 = vld [vmem:[%s1 + $0x210] sm:$0xff]
  %v93 = vld [vmem:[%s1 + $0x218] sm:$0xff]
  %v94 = vld [vmem:[%s1 + $0x220] sm:$0xff]
  %v95 = vld [vmem:[%s1 + $0x228] sm:$0xff]
  %v96 = vld [vmem:[%s1 + $0x230] sm:$0xff]
  %v97 = vld [vmem:[%s1 + $0x238] sm:$0xff]
  %v98 = vld [vmem:[%s1 + $0x240] sm:$0xff]
  %v99 = vld [vmem:[%s1 + $0x248] sm:$0xff]
  %v100 = vld [vmem:[%s1 + $0x250] sm:$0xff]
  %v101 = vld [vmem:[%s1 + $0x258] sm:$0xff]
  %v102 = vld [vmem:[%s1 + $0x260] sm:$0xff]
  %v103 = vld [vmem:[%s1 + $0x268] sm:$0xff]
  %v104 = vld [vmem:[%s1 + $0x270] sm:$0xff]
  %v105 = vld [vmem:[%s1 + $0x278] sm:$0xff]
  %v106 = vld [vmem:[%s1 + $0x280] sm:$0xff]
  %v107 = vld [vmem:[%s1 + $0x288] sm:$0xff]
  %v108 = vld [vmem:[%s1 + $0x290] sm:$0xff]
  %v109 = vld [vmem:[%s1 + $0x298] sm:$0xff]
  %v110 = vld [vmem:[%s1 + $0x2a0] sm:$0xff]
  %v111 = vld [vmem:[%s1 + $0x2a8] sm:$0xff]
  %v112 = vld [vmem:[%s1 + $0x2b0] sm:$0xff]
  %v113 = vld [vmem:[%s1 + $0x2b8] sm:$0xff]
  %v114 = vld [vmem:[%s1 + $0x2c0] sm:$0xff]
  %v115 = vld [vmem:[%s1 + $0x2c8] sm:$0xff]
  %v116 = vld [vmem:[%s1 + $0x2d0] sm:$0xff]
  %v117 = vld [vmem:[%s1 + $0x2d8] sm:$0xff]
  %v118 = vld [vmem:[%s1 + $0x2e0] sm:$0xff]
  %v119 = vld [vmem:[%s1 + $0x2e8] sm:$0xff]
  %v120 = vld [vmem:[%s1 + $0x2f0] sm:$0xff]
  %v121 = vld [vmem:[%s1 + $0x2f8] sm:$0xff]
  %v122 = vld [vmem:[%s1 + $0x300] sm:$0xff]
  %v123 = vld [vmem:[%s1 + $0x308] sm:$0xff]
  %v124 = vld [vmem:[%s1 + $0x310] sm:$0xff]
  %v125 = vld [vmem:[%s1 + $0x318] sm:$0xff]
  %v126 = vld [vmem:[%s1 + $0x320] sm:$0xff]
  %v127 = vld [vmem:[%s1 + $0x328] sm:$0xff]
  %v128 = vld [vmem:[%s1 + $0x330] sm:$0xff]
  %v129 = vld [vmem:[%s1 + $0x338] sm:$0xff]
  %v130 = vld [vmem:[%s1 + $0x340] sm:$0xff]
  %v131 = vld [vmem:[%s1 + $0x348] sm:$0xff]
  %v132 = vld [vmem:[%s1 + $0x350] sm:$0xff]
  %v133 = vld [vmem:[%s1 + $0x358] sm:$0xff]
  %v134 = vld [vmem:[%s1 + $0x360] sm:$0xff]
  %v135 = vld [vmem:[%s1 + $0x368] sm:$0xff]
  %v136 = vld [vmem:[%s1 + $0x370] sm:$0xff]
  %v137 = vld [vmem:[%s1 + $0x378] sm:$0xff]
  %v138 = vld [vmem:[%s1 + $0x380] sm:$0xff]
  %v139 = vld [vmem:[%s1 + $0x388] sm:$0xff]
  %v140 = vld [vmem:[%s1 + $0x390] sm:$0xff]
  %v141 = vld [vmem:[%s1 + $0x398] sm:$0xff]
  %v142 = vld [vmem:[%s1 + $0x3a0] sm:$0xff]
  %v143 = vld [vmem:[%s1 + $0x3a8] sm:$0xff]
  %v144 = vld [vmem:[%s1 + $0x3b0] sm:$0xff]
  %v145 = vld [vmem:[%s1 + $0x3b8] sm:$0xff]
  %v146 = vld [vmem:[%s1 + $0x3c0] sm:$0xff]
  %v147 = vld [vmem:[%s1 + $0x3c8] sm:$0xff]
  %v148 = vld [vmem:[%s1 + $0x3d0] sm:$0xff]
  %v149 = vld [vmem:[%s1 + $0x3d8] sm:$0xff]
  %v150 = vld [vmem:[%s1 + $0x3e0] sm:$0xff]
  %v151 = vld [vmem:[%s1 + $0x3e8] sm:$0xff]
  %v152 = vld [vmem:[%s1 + $0x3f0] sm:$0xff]
  %v153 = vld [vmem:[%s1 + $0x3f8] sm:$0xff]
  %v154 = vld [vmem:[%s1 + $0x400] sm:$0xff]
  %v155 = vld [vmem:[%s1 + $0x408] sm:$0xff]
  %v156 = vld [vmem:[%s1 + $0x410] sm:$0xff]
  %v157 = vld [vmem:[%s1 + $0x418] sm:$0xff]
  %v158 = vld [vmem:[%s1 + $0x420] sm:$0xff]
  %v159 = vld [vmem:[%s1 + $0x428] sm:$0xff]
  %v160 = vld [vmem:[%s1 + $0x430] sm:$0xff]
  %v161 = vld [vmem:[%s1 + $0x438] sm:$0xff]
  %v162 = vld [vmem:[%s1 + $0x440] sm:$0xff]
  %v163 = vld [vmem:[%s1 + $0x448] sm:$0xff]
  %v164 = vld [vmem:[%s1 + $0x450] sm:$0xff]
  %v165 = vld [vmem:[%s1 + $0x458] sm:$0xff]
  %v166 = vld [vmem:[%s1 + $0x460] sm:$0xff]
  %v167 = vld [vmem:[%s1 + $0x468] sm:$0xff]
  %v168 = vld [vmem:[%s1 + $0x470] sm:$0xff]
  %v169 = vld [vmem:[%s1 + $0x478] sm:$0xff]
  %v170 = vld [vmem:[%s1 + $0x480] sm:$0xff]
  %v171 = vld [vmem:[%s1 + $0x488] sm:$0xff]
  %v172 = vld [vmem:[%s1 + $0x490] sm:$0xff]
  %v173 = vld [vmem:[%s1 + $0x498] sm:$0xff]
  %v174 = vld [vmem:[%s1 + $0x4a0] sm:$0xff]
  %v175 = vld [vmem:[%s1 + $0x4a8] sm:$0xff]
  %v176 = vld [vmem:[%s1 + $0x4b0] sm:$0xff]
  %v177 = vld [vmem:[%s1 + $0x4b8] sm:$0xff]
  %v178 = vld [vmem:[%s1 + $0x4c0] sm:$0xff]
  %v179 = vld [vmem:[%s1 + $0x4c8] sm:$0xff]
  %v180 = vld [vmem:[%s1 + $0x4d0] sm:$0xff]
  %v181 = vld [vmem:[%s1 + $0x4d8] sm:$0xff]
  %v182 = vld [vmem:[%s1 + $0x4e0] sm:$0xff]
  %v183 = vld [vmem:[%s1 + $0x4e8] sm:$0xff]
  %v184 = vld [vmem:[%s1 + $0x4f0] sm:$0xff]
  %v185 = vld [vmem:[%s1 + $0x4f8] sm:$0xff]
  %v186 = vld [vmem:[%s1 + $0x500] sm:$0xff]
  %v187 = vld [vmem:[%s1 + $0x508] sm:$0xff]
  %v188 = vld [vmem:[%s1 + $0x510] sm:$0xff]
  %v189 = vld [vmem:[%s1 + $0x518] sm:$0xff]
  %v190 = vld [vmem:[%s1 + $0x520] sm:$0xff]
  %v191 = vld [vmem:[%s1 + $0x528] sm:$0xff]
  %v192 = vld [vmem:[%s1 + $0x530] sm:$0xff]
  %v193 = vld [vmem:[%s1 + $0x538] sm:$0xff]
  %v194 = vld [vmem:[%s1 + $0x540] sm:$0xff]
  %v195 = vld [vmem:[%s1 + $0x548] sm:$0xff]
  %v196 = vld [vmem:[%s1 + $0x550] sm:$0xff]
  %v197 = vld [vmem:[%s1 + $0x558] sm:$0xff]
  %v198 = vld [vmem:[%s1 + $0x560] sm:$0xff]
  %v199 = vld [vmem:[%s1 + $0x568] sm:$0xff]
  %v200 = vld [vmem:[%s1 + $0x570] sm:$0xff]
  %v201 = vld [vmem:[%s1 + $0x578] sm:$0xff]
  %v202 = vld [vmem:[%s1 + $0x580] sm:$0xff]
  %v203 = vld [vmem:[%s1 + $0x588] sm:$0xff]
  %v204 = vld [vmem:[%s1 + $0x590] sm:$0xff]
  %v205 = vld [vmem:[%s1 + $0x598] sm:$0xff]
  %v206 = vld [vmem:[%s1 + $0x5a0] sm:$0xff]
  %v207 = vld [vmem:[%s1 + $0x5a8] sm:$0xff]
  %v208 = vld [vmem:[%s1 + $0x5b0] sm:$0xff]
  %v209 = vld [vmem:[%s1 + $0x5b8] sm:$0xff]
  %v210 = vld [vmem:[%s1 + $0x5c0] sm:$0xff]
  %v211 = vld [vmem:[%s1 + $0x5c8] sm:$0xff]
  %v212 = vld [vmem:[%s1 + $0x5d0] sm:$0xff]
  %v213 = vld [vmem:[%s1 + $0x5d8] sm:$0xff]
  %v214 = vld [vmem:[%s1 + $0x5e0] sm:$0xff]
  %v215 = vld [vmem:[%s1 + $0x5e8] sm:$0xff]
  %v216 = vld [vmem:[%s1 + $0x5f0] sm:$0xff]
  %v217 = vld [vmem:[%s1 + $0x5f8] sm:$0xff]
  %v218 = vld [vmem:[%s2] sm:$0x3]
  %v220 = vperm.slane %v218, 0
  %v221 = vperm.slane %v218, 1
  %224 = vmatpush.msra.mxu0 %v56
  %225 = vmatpush.msra.mxu0 %v54
  %226 = vmatpush.msra.mxu0 %v52
  %227 = vmatpush.msra.mxu0 %v50
  %228 = vmatpush.msra.mxu0 %v48
  %229 = vmatpush.msra.mxu0 %v46
  %230 = vmatpush.msra.mxu0 %v44
  %231 = vmatpush.msra.mxu0 %v42
  %232 = vmatpush.msra.mxu0 %v40
  %233 = vmatpush.msra.mxu0 %v38
  %234 = vmatpush.msra.mxu0 %v36
  %235 = vmatpush.msra.mxu0 %v34
  %236 = vmatpush.msra.mxu0 %v32
  %237 = vmatpush.msra.mxu0 %v30
  %238 = vmatpush.msra.mxu0 %v28
  %239 = vmatpush.msra.mxu0 %v26
  %240 = vmatmul.f32.gmra.mxu0 %v14
  %v241 = vpop.f32.mrf.mxu0
  %v242 = vadd.f32 %v220, %v241
  %243 = vmatmul.f32.gmra.mxu0 %v20
  %v244 = vpop.f32.mrf.mxu0
  %v245 = vadd.f32 %v220, %v244
  %246 = vdwg.mxu0
  %247 = vmatpush.msra.mxu0 %v88
  %248 = vmatpush.msra.mxu0 %v86
  %249 = vmatpush.msra.mxu0 %v84
  %250 = vmatpush.msra.mxu0 %v82
  %251 = vmatpush.msra.mxu0 %v80
  %252 = vmatpush.msra.mxu0 %v78
  %253 = vmatpush.msra.mxu0 %v76
  %254 = vmatpush.msra.mxu0 %v74
  %255 = vmatpush.msra.mxu0 %v72
  %256 = vmatpush.msra.mxu0 %v70
  %257 = vmatpush.msra.mxu0 %v68
  %258 = vmatpush.msra.mxu0 %v66
  %259 = vmatpush.msra.mxu0 %v64
  %260 = vmatpush.msra.mxu0 %v62
  %261 = vmatpush.msra.mxu0 %v60
  %262 = vmatpush.msra.mxu0 %v58
  %263 = vmatmul.f32.gmra.mxu0 %v15
  %v264 = vpop.f32.mrf.mxu0
  %v265 = vadd.f32 %v242, %v264
  %266 = vmatmul.f32.gmra.mxu0 %v21
  %v267 = vpop.f32.mrf.mxu0
  %v268 = vadd.f32 %v245, %v267
  %269 = vdwg.mxu0
  %270 = vmatpush.msra.mxu0 %v120
  %271 = vmatpush.msra.mxu0 %v118
  %272 = vmatpush.msra.mxu0 %v116
  %273 = vmatpush.msra.mxu0 %v114
  %274 = vmatpush.msra.mxu0 %v112
  %275 = vmatpush.msra.mxu0 %v110
  %276 = vmatpush.msra.mxu0 %v108
  %277 = vmatpush.msra.mxu0 %v106
  %278 = vmatpush.msra.mxu0 %v104
  %279 = vmatpush.msra.mxu0 %v102
  %280 = vmatpush.msra.mxu0 %v100
  %281 = vmatpush.msra.mxu0 %v98
  %282 = vmatpush.msra.mxu0 %v96
  %283 = vmatpush.msra.mxu0 %v94
  %284 = vmatpush.msra.mxu0 %v92
  %285 = vmatpush.msra.mxu0 %v90
  %286 = vmatmul.f32.gmra.mxu0 %v16
  %v287 = vpop.f32.mrf.mxu0
  %v288 = vadd.f32 %v265, %v287
  %289 = vmatmul.f32.gmra.mxu0 %v22
  %v290 = vpop.f32.mrf.mxu0
  %v291 = vadd.f32 %v268, %v290
  %292 = vdwg.mxu0
  %293 = vmatpush.msra.mxu0 %v152
  %294 = vmatpush.msra.mxu0 %v150
  %295 = vmatpush.msra.mxu0 %v148
  %296 = vmatpush.msra.mxu0 %v146
  %297 = vmatpush.msra.mxu0 %v144
  %298 = vmatpush.msra.mxu0 %v142
  %299 = vmatpush.msra.mxu0 %v140
  %300 = vmatpush.msra.mxu0 %v138
  %301 = vmatpush.msra.mxu0 %v136
  %302 = vmatpush.msra.mxu0 %v134
  %303 = vmatpush.msra.mxu0 %v132
  %304 = vmatpush.msra.mxu0 %v130
  %305 = vmatpush.msra.mxu0 %v128
  %306 = vmatpush.msra.mxu0 %v126
  %307 = vmatpush.msra.mxu0 %v124
  %308 = vmatpush.msra.mxu0 %v122
  %309 = vmatmul.f32.gmra.mxu0 %v17
  %v310 = vpop.f32.mrf.mxu0
  %v311 = vadd.f32 %v288, %v310
  %312 = vmatmul.f32.gmra.mxu0 %v23
  %v313 = vpop.f32.mrf.mxu0
  %v314 = vadd.f32 %v291, %v313
  %315 = vdwg.mxu0
  %316 = vmatpush.msra.mxu0 %v184
  %317 = vmatpush.msra.mxu0 %v182
  %318 = vmatpush.msra.mxu0 %v180
  %319 = vmatpush.msra.mxu0 %v178
  %320 = vmatpush.msra.mxu0 %v176
  %321 = vmatpush.msra.mxu0 %v174
  %322 = vmatpush.msra.mxu0 %v172
  %323 = vmatpush.msra.mxu0 %v170
  %324 = vmatpush.msra.mxu0 %v168
  %325 = vmatpush.msra.mxu0 %v166
  %326 = vmatpush.msra.mxu0 %v164
  %327 = vmatpush.msra.mxu0 %v162
  %328 = vmatpush.msra.mxu0 %v160
  %329 = vmatpush.msra.mxu0 %v158
  %330 = vmatpush.msra.mxu0 %v156
  %331 = vmatpush.msra.mxu0 %v154
  %332 = vmatmul.f32.gmra.mxu0 %v18
  %v333 = vpop.f32.mrf.mxu0
  %v334 = vadd.f32 %v311, %v333
  %335 = vmatmul.f32.gmra.mxu0 %v24
  %v336 = vpop.f32.mrf.mxu0
  %v337 = vadd.f32 %v314, %v336
  %338 = vdwg.mxu0
  %339 = vmatpush.msra.mxu0 %v216
  %340 = vmatpush.msra.mxu0 %v214
  %341 = vmatpush.msra.mxu0 %v212
  %342 = vmatpush.msra.mxu0 %v210
  %343 = vmatpush.msra.mxu0 %v208
  %344 = vmatpush.msra.mxu0 %v206
  %345 = vmatpush.msra.mxu0 %v204
  %346 = vmatpush.msra.mxu0 %v202
  %347 = vmatpush.msra.mxu0 %v200
  %348 = vmatpush.msra.mxu0 %v198
  %349 = vmatpush.msra.mxu0 %v196
  %350 = vmatpush.msra.mxu0 %v194
  %351 = vmatpush.msra.mxu0 %v192
  %352 = vmatpush.msra.mxu0 %v190
  %353 = vmatpush.msra.mxu0 %v188
  %354 = vmatpush.msra.mxu0 %v186
  %355 = vmatmul.f32.gmra.mxu0 %v19
  %v356 = vpop.f32.mrf.mxu0
  %v357 = vadd.f32 %v334, %v356
  %358 = vmatmul.f32.gmra.mxu0 %v25
  %v359 = vpop.f32.mrf.mxu0
  %v360 = vadd.f32 %v337, %v359
  %361 = vdwg.mxu0
  %362 = vmatpush.msra.mxu0 %v57
  %363 = vmatpush.msra.mxu0 %v55
  %364 = vmatpush.msra.mxu0 %v53
  %365 = vmatpush.msra.mxu0 %v51
  %366 = vmatpush.msra.mxu0 %v49
  %367 = vmatpush.msra.mxu0 %v47
  %368 = vmatpush.msra.mxu0 %v45
  %369 = vmatpush.msra.mxu0 %v43
  %370 = vmatpush.msra.mxu0 %v41
  %371 = vmatpush.msra.mxu0 %v39
  %372 = vmatpush.msra.mxu0 %v37
  %373 = vmatpush.msra.mxu0 %v35
  %374 = vmatpush.msra.mxu0 %v33
  %375 = vmatpush.msra.mxu0 %v31
  %376 = vmatpush.msra.mxu0 %v29
  %377 = vmatpush.msra.mxu0 %v27
  %378 = vmatmul.f32.gmra.mxu0 %v14
  %v379 = vpop.f32.mrf.mxu0
  %v380 = vadd.f32 %v221, %v379
  %381 = vmatmul.f32.gmra.mxu0 %v20
  %v382 = vpop.f32.mrf.mxu0
  %v383 = vadd.f32 %v221, %v382
  %384 = vdwg.mxu0
  %385 = vmatpush.msra.mxu0 %v89
  %386 = vmatpush.msra.mxu0 %v87
  %387 = vmatpush.msra.mxu0 %v85
  %388 = vmatpush.msra.mxu0 %v83
  %389 = vmatpush.msra.mxu0 %v81
  %390 = vmatpush.msra.mxu0 %v79
  %391 = vmatpush.msra.mxu0 %v77
  %392 = vmatpush.msra.mxu0 %v75
  %393 = vmatpush.msra.mxu0 %v73
  %394 = vmatpush.msra.mxu0 %v71
  %395 = vmatpush.msra.mxu0 %v69
  %396 = vmatpush.msra.mxu0 %v67
  %397 = vmatpush.msra.mxu0 %v65
  %398 = vmatpush.msra.mxu0 %v63
  %399 = vmatpush.msra.mxu0 %v61
  %400 = vmatpush.msra.mxu0 %v59
  %401 = vmatmul.f32.gmra.mxu0 %v15
  %v402 = vpop.f32.mrf.mxu0
  %v403 = vadd.f32 %v380, %v402
  %404 = vmatmul.f32.gmra.mxu0 %v21
  %v405 = vpop.f32.mrf.mxu0
  %v406 = vadd.f32 %v383, %v405
  %407 = vdwg.mxu0
  %408 = vmatpush.msra.mxu0 %v121
  %409 = vmatpush.msra.mxu0 %v119
  %410 = vmatpush.msra.mxu0 %v117
  %411 = vmatpush.msra.mxu0 %v115
  %412 = vmatpush.msra.mxu0 %v113
  %413 = vmatpush.msra.mxu0 %v111
  %414 = vmatpush.msra.mxu0 %v109
  %415 = vmatpush.msra.mxu0 %v107
  %416 = vmatpush.msra.mxu0 %v105
  %417 = vmatpush.msra.mxu0 %v103
  %418 = vmatpush.msra.mxu0 %v101
  %419 = vmatpush.msra.mxu0 %v99
  %420 = vmatpush.msra.mxu0 %v97
  %421 = vmatpush.msra.mxu0 %v95
  %422 = vmatpush.msra.mxu0 %v93
  %423 = vmatpush.msra.mxu0 %v91
  %424 = vmatmul.f32.gmra.mxu0 %v16
  %v425 = vpop.f32.mrf.mxu0
  %v426 = vadd.f32 %v403, %v425
  %427 = vmatmul.f32.gmra.mxu0 %v22
  %v428 = vpop.f32.mrf.mxu0
  %v429 = vadd.f32 %v406, %v428
  %430 = vdwg.mxu0
  %431 = vmatpush.msra.mxu0 %v153
  %432 = vmatpush.msra.mxu0 %v151
  %433 = vmatpush.msra.mxu0 %v149
  %434 = vmatpush.msra.mxu0 %v147
  %435 = vmatpush.msra.mxu0 %v145
  %436 = vmatpush.msra.mxu0 %v143
  %437 = vmatpush.msra.mxu0 %v141
  %438 = vmatpush.msra.mxu0 %v139
  %439 = vmatpush.msra.mxu0 %v137
  %440 = vmatpush.msra.mxu0 %v135
  %441 = vmatpush.msra.mxu0 %v133
  %442 = vmatpush.msra.mxu0 %v131
  %443 = vmatpush.msra.mxu0 %v129
  %444 = vmatpush.msra.mxu0 %v127
  %445 = vmatpush.msra.mxu0 %v125
  %446 = vmatpush.msra.mxu0 %v123
  %447 = vmatmul.f32.gmra.mxu0 %v17
  %v448 = vpop.f32.mrf.mxu0
  %v449 = vadd.f32 %v426, %v448
  %450 = vmatmul.f32.gmra.mxu0 %v23
  %v451 = vpop.f32.mrf.mxu0
  %v452 = vadd.f32 %v429, %v451
  %453 = vdwg.mxu0
  %454 = vmatpush.msra.mxu0 %v185
  %455 = vmatpush.msra.mxu0 %v183
  %456 = vmatpush.msra.mxu0 %v181
  %457 = vmatpush.msra.mxu0 %v179
  %458 = vmatpush.msra.mxu0 %v177
  %459 = vmatpush.msra.mxu0 %v175
  %460 = vmatpush.msra.mxu0 %v173
  %461 = vmatpush.msra.mxu0 %v171
  %462 = vmatpush.msra.mxu0 %v169
  %463 = vmatpush.msra.mxu0 %v167
  %464 = vmatpush.msra.mxu0 %v165
  %465 = vmatpush.msra.mxu0 %v163
  %466 = vmatpush.msra.mxu0 %v161
  %467 = vmatpush.msra.mxu0 %v159
  %468 = vmatpush.msra.mxu0 %v157
  %469 = vmatpush.msra.mxu0 %v155
  %470 = vmatmul.f32.gmra.mxu0 %v18
  %v471 = vpop.f32.mrf.mxu0
  %v472 = vadd.f32 %v449, %v471
  %473 = vmatmul.f32.gmra.mxu0 %v24
  %v474 = vpop.f32.mrf.mxu0
  %v475 = vadd.f32 %v452, %v474
  %476 = vdwg.mxu0
  %477 = vmatpush.msra.mxu0 %v217
  %478 = vmatpush.msra.mxu0 %v215
  %479 = vmatpush.msra.mxu0 %v213
  %480 = vmatpush.msra.mxu0 %v211
  %481 = vmatpush.msra.mxu0 %v209
  %482 = vmatpush.msra.mxu0 %v207
  %483 = vmatpush.msra.mxu0 %v205
  %484 = vmatpush.msra.mxu0 %v203
  %485 = vmatpush.msra.mxu0 %v201
  %486 = vmatpush.msra.mxu0 %v199
  %487 = vmatpush.msra.mxu0 %v197
  %488 = vmatpush.msra.mxu0 %v195
  %489 = vmatpush.msra.mxu0 %v193
  %490 = vmatpush.msra.mxu0 %v191
  %491 = vmatpush.msra.mxu0 %v189
  %492 = vmatpush.msra.mxu0 %v187
  %493 = vmatmul.f32.gmra.mxu0 %v19
  %v494 = vpop.f32.mrf.mxu0
  %v495 = vadd.f32 %v472, %v494
  %496 = vmatmul.f32.gmra.mxu0 %v25
  %v497 = vpop.f32.mrf.mxu0
  %v498 = vadd.f32 %v475, %v497
  %499 = vdwg.mxu0
  %500 = vst [vmem:[%s3] sm:$0xff] %v357
  %501 = vst [vmem:[%s3 + $0x8] sm:$0xff] %v495
  %502 = vst [vmem:[%s3 + $0x10] sm:$0xff] %v360
  %503 = vst [vmem:[%s3 + $0x18] sm:$0xff] %v498
  // Predicated region
  $region14: #{noise_remover_forward.9} parent=0 // pred_check
    _
  $region15: #{noise_remover_forward.9} parent=0 // pred_check_branch
    %505 = sbr.rel (0) target = $region17
  $region16: #{noise_remover_forward.9} parent=0 // pred_region
    _
  $region17: #{noise_remover_forward.9} parent=0 // pred_fallthru
    _
  // Predicated region
  $region18: #{noise_remover_forward.9} parent=0 // pred_check
    _
  $region19: #{noise_remover_forward.9} parent=0 // pred_check_branch
    %507 = sbr.rel (0) target = $region21
  $region20: #{noise_remover_forward.9} parent=0 // pred_region
    _
  $region21: #{noise_remover_forward.9} parent=0 // pred_fallthru
    _

// kernel: noise_remover_forward.10
$region0: #{noise_remover_forward.10}
  #allocation0 [shape = 'u32[]', space=smem, size = 0x4, offset = 0x4, fixed_abs, tag = 'smem constant byte address 0x4 - core index']
  #allocation1 [shape = 'u32[72,128]{1,0:T(1,128)}', space=vmem, size = 0x9000, scoped, tag = 'internal scratch']
  %s0 = inlined_call_operand.vmem [shape: f32[30,384], index: 0, kind: input, shape index: {}]
  %s1 = inlined_call_operand.vmem [shape: f32[384,128], index: 1, kind: input, shape index: {}]
  %s2 = inlined_call_operand.vmem [shape: f32[1,128], index: 2, kind: input, shape index: {}]
  %s3 = inlined_call_operand.vmem [shape: f32[30,128], index: 3, kind: output, shape index: {}]
  %s4 = sld [smem:[#allocation0]]
  $region22: #{noise_remover_forward.10} parent=0
    _
  %s6 = ssub.s32 1, %s4
  %s7 = scalar_select 0, %s6, %s4
  // Predicated region
  $region2: #{noise_remover_forward.10} parent=0 // pred_check
    _
  $region3: #{noise_remover_forward.10} parent=0 // pred_check_branch
    %9 = sbr.rel (0) target = $region5
  $region4: #{noise_remover_forward.10} parent=0 // pred_region
    _
  $region5: #{noise_remover_forward.10} parent=0 // pred_fallthru
    _
  // Predicated region
  $region6: #{noise_remover_forward.10} parent=0 // pred_check
    _
  $region7: #{noise_remover_forward.10} parent=0 // pred_check_branch
    %11 = sbr.rel (0) target = $region9
  $region8: #{noise_remover_forward.10} parent=0 // pred_region
    _
  $region9: #{noise_remover_forward.10} parent=0 // pred_fallthru
    _
  // Predicated region
  $region10: #{noise_remover_forward.10} parent=0 // pred_check
    _
  $region11: #{noise_remover_forward.10} parent=0 // pred_check_branch
    %13 = sbr.rel (0) target = $region13
  $region12: #{noise_remover_forward.10} parent=0 // pred_region
    _
  $region13: #{noise_remover_forward.10} parent=0 // pred_fallthru
    _
  %v14 = vld [vmem:[%s0] sm:$0xff]
  %v15 = vld [vmem:[%s0 + $0x8] sm:$0xff]
  %v16 = vld [vmem:[%s0 + $0x10] sm:$0xff]
  %v17 = vld [vmem:[%s0 + $0x18] sm:$0xff]
  %v18 = vld [vmem:[%s0 + $0x20] sm:$0xff]
  %v19 = vld [vmem:[%s0 + $0x28] sm:$0xff]
  %v20 = vld [vmem:[%s0 + $0x30] sm:$0xff]
  %v21 = vld [vmem:[%s0 + $0x38] sm:$0xff]
  %v22 = vld [vmem:[%s0 + $0x40] sm:$0xff]
  %v23 = vld [vmem:[%s0 + $0x48] sm:$0x3f]
  %v24 = vld [vmem:[%s0 + $0x50] sm:$0x3f]
  %v25 = vld [vmem:[%s0 + $0x58] sm:$0x3f]
  %v26 = vld [vmem:[%s1] sm:$0xff]
  %v27 = vld [vmem:[%s1 + $0x8] sm:$0xff]
  %v28 = vld [vmem:[%s1 + $0x10] sm:$0xff]
  %v29 = vld [vmem:[%s1 + $0x18] sm:$0xff]
  %v30 = vld [vmem:[%s1 + $0x20] sm:$0xff]
  %v31 = vld [vmem:[%s1 + $0x28] sm:$0xff]
  %v32 = vld [vmem:[%s1 + $0x30] sm:$0xff]
  %v33 = vld [vmem:[%s1 + $0x38] sm:$0xff]
  %v34 = vld [vmem:[%s1 + $0x40] sm:$0xff]
  %v35 = vld [vmem:[%s1 + $0x48] sm:$0xff]
  %v36 = vld [vmem:[%s1 + $0x50] sm:$0xff]
  %v37 = vld [vmem:[%s1 + $0x58] sm:$0xff]
  %v38 = vld [vmem:[%s1 + $0x60] sm:$0xff]
  %v39 = vld [vmem:[%s1 + $0x68] sm:$0xff]
  %v40 = vld [vmem:[%s1 + $0x70] sm:$0xff]
  %v41 = vld [vmem:[%s1 + $0x78] sm:$0xff]
  %v42 = vld [vmem:[%s1 + $0x80] sm:$0xff]
  %v43 = vld [vmem:[%s1 + $0x88] sm:$0xff]
  %v44 = vld [vmem:[%s1 + $0x90] sm:$0xff]
  %v45 = vld [vmem:[%s1 + $0x98] sm:$0xff]
  %v46 = vld [vmem:[%s1 + $0xa0] sm:$0xff]
  %v47 = vld [vmem:[%s1 + $0xa8] sm:$0xff]
  %v48 = vld [vmem:[%s1 + $0xb0] sm:$0xff]
  %v49 = vld [vmem:[%s1 + $0xb8] sm:$0xff]
  %v50 = vld [vmem:[%s1 + $0xc0] sm:$0xff]
  %v51 = vld [vmem:[%s1 + $0xc8] sm:$0xff]
  %v52 = vld [vmem:[%s1 + $0xd0] sm:$0xff]
  %v53 = vld [vmem:[%s1 + $0xd8] sm:$0xff]
  %v54 = vld [vmem:[%s1 + $0xe0] sm:$0xff]
  %v55 = vld [vmem:[%s1 + $0xe8] sm:$0xff]
  %v56 = vld [vmem:[%s1 + $0xf0] sm:$0xff]
  %v57 = vld [vmem:[%s1 + $0xf8] sm:$0xff]
  %v58 = vld [vmem:[%s1 + $0x100] sm:$0xff]
  %v59 = vld [vmem:[%s1 + $0x108] sm:$0xff]
  %v60 = vld [vmem:[%s1 + $0x110] sm:$0xff]
  %v61 = vld [vmem:[%s1 + $0x118] sm:$0xff]
  %v62 = vld [vmem:[%s1 + $0x120] sm:$0xff]
  %v63 = vld [vmem:[%s1 + $0x128] sm:$0xff]
  %v64 = vld [vmem:[%s1 + $0x130] sm:$0xff]
  %v65 = vld [vmem:[%s1 + $0x138] sm:$0xff]
  %v66 = vld [vmem:[%s1 + $0x140] sm:$0xff]
  %v67 = vld [vmem:[%s1 + $0x148] sm:$0xff]
  %v68 = vld [vmem:[%s1 + $0x150] sm:$0xff]
  %v69 = vld [vmem:[%s1 + $0x158] sm:$0xff]
  %v70 = vld [vmem:[%s1 + $0x160] sm:$0xff]
  %v71 = vld [vmem:[%s1 + $0x168] sm:$0xff]
  %v72 = vld [vmem:[%s1 + $0x170] sm:$0xff]
  %v73 = vld [vmem:[%s1 + $0x178] sm:$0xff]
  %v74 = vld [vmem:[%s2] sm:$0x1]
  %v76 = vperm.slane %v74, 0
  %78 = vmatpush.msra.mxu0 %v41
  %79 = vmatpush.msra.mxu0 %v40
  %80 = vmatpush.msra.mxu0 %v39
  %81 = vmatpush.msra.mxu0 %v38
  %82 = vmatpush.msra.mxu0 %v37
  %83 = vmatpush.msra.mxu0 %v36
  %84 = vmatpush.msra.mxu0 %v35
  %85 = vmatpush.msra.mxu0 %v34
  %86 = vmatpush.msra.mxu0 %v33
  %87 = vmatpush.msra.mxu0 %v32
  %88 = vmatpush.msra.mxu0 %v31
  %89 = vmatpush.msra.mxu0 %v30
  %90 = vmatpush.msra.mxu0 %v29
  %91 = vmatpush.msra.mxu0 %v28
  %92 = vmatpush.msra.mxu0 %v27
  %93 = vmatpush.msra.mxu0 %v26
  %94 = vmatmul.f32.gmra.mxu0 %v14
  %v95 = vpop.f32.mrf.mxu0
  %v96 = vadd.f32 %v76, %v95
  %97 = vmatmul.f32.gmra.mxu0 %v17
  %v98 = vpop.f32.mrf.mxu0
  %v99 = vadd.f32 %v76, %v98
  %100 = vmatmul.f32.gmra.mxu0 %v20
  %v101 = vpop.f32.mrf.mxu0
  %v102 = vadd.f32 %v76, %v101
  %103 = vmatmul.f32.gmra.mxu0 %v23
  %v104 = vpop.f32.mrf.mxu0
  %v105 = vadd.f32 %v76, %v104
  %106 = vdwg.mxu0
  %107 = vmatpush.msra.mxu0 %v57
  %108 = vmatpush.msra.mxu0 %v56
  %109 = vmatpush.msra.mxu0 %v55
  %110 = vmatpush.msra.mxu0 %v54
  %111 = vmatpush.msra.mxu0 %v53
  %112 = vmatpush.msra.mxu0 %v52
  %113 = vmatpush.msra.mxu0 %v51
  %114 = vmatpush.msra.mxu0 %v50
  %115 = vmatpush.msra.mxu0 %v49
  %116 = vmatpush.msra.mxu0 %v48
  %117 = vmatpush.msra.mxu0 %v47
  %118 = vmatpush.msra.mxu0 %v46
  %119 = vmatpush.msra.mxu0 %v45
  %120 = vmatpush.msra.mxu0 %v44
  %121 = vmatpush.msra.mxu0 %v43
  %122 = vmatpush.msra.mxu0 %v42
  %123 = vmatmul.f32.gmra.mxu0 %v15
  %v124 = vpop.f32.mrf.mxu0
  %v125 = vadd.f32 %v96, %v124
  %126 = vmatmul.f32.gmra.mxu0 %v18
  %v127 = vpop.f32.mrf.mxu0
  %v128 = vadd.f32 %v99, %v127
  %129 = vmatmul.f32.gmra.mxu0 %v21
  %v130 = vpop.f32.mrf.mxu0
  %v131 = vadd.f32 %v102, %v130
  %132 = vmatmul.f32.gmra.mxu0 %v24
  %v133 = vpop.f32.mrf.mxu0
  %v134 = vadd.f32 %v105, %v133
  %135 = vdwg.mxu0
  %136 = vmatpush.msra.mxu0 %v73
  %137 = vmatpush.msra.mxu0 %v72
  %138 = vmatpush.msra.mxu0 %v71
  %139 = vmatpush.msra.mxu0 %v70
  %140 = vmatpush.msra.mxu0 %v69
  %141 = vmatpush.msra.mxu0 %v68
  %142 = vmatpush.msra.mxu0 %v67
  %143 = vmatpush.msra.mxu0 %v66
  %144 = vmatpush.msra.mxu0 %v65
  %145 = vmatpush.msra.mxu0 %v64
  %146 = vmatpush.msra.mxu0 %v63
  %147 = vmatpush.msra.mxu0 %v62
  %148 = vmatpush.msra.mxu0 %v61
  %149 = vmatpush.msra.mxu0 %v60
  %150 = vmatpush.msra.mxu0 %v59
  %151 = vmatpush.msra.mxu0 %v58
  %152 = vmatmul.f32.gmra.mxu0 %v16
  %v153 = vpop.f32.mrf.mxu0
  %v154 = vadd.f32 %v125, %v153
  %155 = vmatmul.f32.gmra.mxu0 %v19
  %v156 = vpop.f32.mrf.mxu0
  %v157 = vadd.f32 %v128, %v156
  %158 = vmatmul.f32.gmra.mxu0 %v22
  %v159 = vpop.f32.mrf.mxu0
  %v160 = vadd.f32 %v131, %v159
  %161 = vmatmul.f32.gmra.mxu0 %v25
  %v162 = vpop.f32.mrf.mxu0
  %v163 = vadd.f32 %v134, %v162
  %164 = vdwg.mxu0
  %165 = vst [vmem:[%s3] sm:$0xff] %v154
  %166 = vst [vmem:[%s3 + $0x8] sm:$0xff] %v157
  %167 = vst [vmem:[%s3 + $0x10] sm:$0xff] %v160
  %168 = vst [vmem:[%s3 + $0x18] sm:$0x3f] %v163
  // Predicated region
  $region14: #{noise_remover_forward.10} parent=0 // pred_check
    _
  $region15: #{noise_remover_forward.10} parent=0 // pred_check_branch
    %170 = sbr.rel (0) target = $region17
  $region16: #{noise_remover_forward.10} parent=0 // pred_region
    _
  $region17: #{noise_remover_forward.10} parent=0 // pred_fallthru
    _
  // Predicated region
  $region18: #{noise_remover_forward.10} parent=0 // pred_check
    _
  $region19: #{noise_remover_forward.10} parent=0 // pred_check_branch
    %172 = sbr.rel (0) target = $region21
  $region20: #{noise_remover_forward.10} parent=0 // pred_region
    _
  $region21: #{noise_remover_forward.10} parent=0 // pred_fallthru
    _

// kernel: noise_remover_forward.11
$region0: #{noise_remover_forward.11}
  #allocation0 [shape = 'u32[]', space=smem, size = 0x4, offset = 0x4, fixed_abs, tag = 'smem constant byte address 0x4 - core index']
  #allocation1 [shape = 'u32[72,128]{1,0:T(1,128)}', space=vmem, size = 0x9000, scoped, tag = 'internal scratch']
  %s0 = inlined_call_operand.vmem [shape: f32[58,192], index: 0, kind: input, shape index: {}]
  %s1 = inlined_call_operand.vmem [shape: f32[192,2], index: 1, kind: input, shape index: {}]
  %s2 = inlined_call_operand.vmem [shape: f32[1,2], index: 2, kind: input, shape index: {}]
  %s3 = inlined_call_operand.vmem [shape: f32[58,2], index: 3, kind: output, shape index: {}]
  %s4 = sld [smem:[#allocation0]]
  $region22: #{noise_remover_forward.11} parent=0
    _
  %s6 = ssub.s32 1, %s4
  %s7 = scalar_select 0, %s6, %s4
  // Predicated region
  $region2: #{noise_remover_forward.11} parent=0 // pred_check
    _
  $region3: #{noise_remover_forward.11} parent=0 // pred_check_branch
    %9 = sbr.rel (0) target = $region5
  $region4: #{noise_remover_forward.11} parent=0 // pred_region
    _
  $region5: #{noise_remover_forward.11} parent=0 // pred_fallthru
    _
  // Predicated region
  $region6: #{noise_remover_forward.11} parent=0 // pred_check
    _
  $region7: #{noise_remover_forward.11} parent=0 // pred_check_branch
    %11 = sbr.rel (0) target = $region9
  $region8: #{noise_remover_forward.11} parent=0 // pred_region
    _
  $region9: #{noise_remover_forward.11} parent=0 // pred_fallthru
    _
  // Predicated region
  $region10: #{noise_remover_forward.11} parent=0 // pred_check
    _
  $region11: #{noise_remover_forward.11} parent=0 // pred_check_branch
    %13 = sbr.rel (0) target = $region13
  $region12: #{noise_remover_forward.11} parent=0 // pred_region
    _
  $region13: #{noise_remover_forward.11} parent=0 // pred_fallthru
    _
  %v14 = vld [vmem:[%s0] sm:$0xff]
  %v15 = vld [vmem:[%s0 + $0x8] sm:$0xff]
  %v16 = vld [vmem:[%s0 + $0x10] sm:$0xff]
  %v17 = vld [vmem:[%s0 + $0x18] sm:$0xff]
  %v18 = vld [vmem:[%s0 + $0x20] sm:$0xff]
  %v19 = vld [vmem:[%s0 + $0x28] sm:$0xff]
  %v20 = vld [vmem:[%s0 + $0x30] sm:$0xff]
  %v21 = vld [vmem:[%s0 + $0x38] sm:$0xff]
  %v22 = vld [vmem:[%s0 + $0x40] sm:$0xff]
  %v23 = vld [vmem:[%s0 + $0x48] sm:$0xff]
  %v24 = vld [vmem:[%s0 + $0x50] sm:$0xff]
  %v25 = vld [vmem:[%s0 + $0x58] sm:$0xff]
  %v26 = vld [vmem:[%s0 + $0x60] sm:$0xff]
  %v27 = vld [vmem:[%s0 + $0x68] sm:$0xff]
  %v28 = vld [vmem:[%s0 + $0x70] sm:$0x3]
  %v29 = vld [vmem:[%s0 + $0x78] sm:$0x3]
  %v30 = vld [vmem:[%s1] sm:$0xff]
  %v31 = vld [vmem:[%s1 + $0x8] sm:$0xff]
  %v32 = vld [vmem:[%s1 + $0x10] sm:$0xff]
  %v33 = vld [vmem:[%s1 + $0x18] sm:$0xff]
  %v34 = vld [vmem:[%s1 + $0x20] sm:$0xff]
  %v35 = vld [vmem:[%s1 + $0x28] sm:$0xff]
  %v36 = vld [vmem:[%s1 + $0x30] sm:$0xff]
  %v37 = vld [vmem:[%s1 + $0x38] sm:$0xff]
  %v38 = vld [vmem:[%s1 + $0x40] sm:$0xff]
  %v39 = vld [vmem:[%s1 + $0x48] sm:$0xff]
  %v40 = vld [vmem:[%s1 + $0x50] sm:$0xff]
  %v41 = vld [vmem:[%s1 + $0x58] sm:$0xff]
  %v42 = vld [vmem:[%s1 + $0x60] sm:$0xff]
  %v43 = vld [vmem:[%s1 + $0x68] sm:$0xff]
  %v44 = vld [vmem:[%s1 + $0x70] sm:$0xff]
  %v45 = vld [vmem:[%s1 + $0x78] sm:$0xff]
  %v46 = vld [vmem:[%s1 + $0x80] sm:$0xff]
  %v47 = vld [vmem:[%s1 + $0x88] sm:$0xff]
  %v48 = vld [vmem:[%s1 + $0x90] sm:$0xff]
  %v49 = vld [vmem:[%s1 + $0x98] sm:$0xff]
  %v50 = vld [vmem:[%s1 + $0xa0] sm:$0xff]
  %v51 = vld [vmem:[%s1 + $0xa8] sm:$0xff]
  %v52 = vld [vmem:[%s1 + $0xb0] sm:$0xff]
  %v53 = vld [vmem:[%s1 + $0xb8] sm:$0xff]
  %v54 = vld [vmem:[%s2] sm:$0x1]
  %v56 = vperm.slane %v54, 0
  %vm58 = vcmask 523264
  %v60 = vsel %vm58, %v15, 0
  %v63 = vsel %vm58, %v17, 0
  %v66 = vsel %vm58, %v19, 0
  %v69 = vsel %vm58, %v21, 0
  %v72 = vsel %vm58, %v23, 0
  %v75 = vsel %vm58, %v25, 0
  %v78 = vsel %vm58, %v27, 0
  %v81 = vsel %vm58, %v29, 0
  %83 = vmatpush.msra.mxu0 %v45
  %84 = vmatpush.msra.mxu0 %v44
  %85 = vmatpush.msra.mxu0 %v43
  %86 = vmatpush.msra.mxu0 %v42
  %87 = vmatpush.msra.mxu0 %v41
  %88 = vmatpush.msra.mxu0 %v40
  %89 = vmatpush.msra.mxu0 %v39
  %90 = vmatpush.msra.mxu0 %v38
  %91 = vmatpush.msra.mxu0 %v37
  %92 = vmatpush.msra.mxu0 %v36
  %93 = vmatpush.msra.mxu0 %v35
  %94 = vmatpush.msra.mxu0 %v34
  %95 = vmatpush.msra.mxu0 %v33
  %96 = vmatpush.msra.mxu0 %v32
  %97 = vmatpush.msra.mxu0 %v31
  %98 = vmatpush.msra.mxu0 %v30
  %99 = vmatmul.f32.gmra.mxu0 %v14
  %v100 = vpop.f32.mrf.mxu0
  %v101 = vadd.f32 %v56, %v100
  %102 = vmatmul.f32.gmra.mxu0 %v16
  %v103 = vpop.f32.mrf.mxu0
  %v104 = vadd.f32 %v56, %v103
  %105 = vmatmul.f32.gmra.mxu0 %v18
  %v106 = vpop.f32.mrf.mxu0
  %v107 = vadd.f32 %v56, %v106
  %108 = vmatmul.f32.gmra.mxu0 %v20
  %v109 = vpop.f32.mrf.mxu0
  %v110 = vadd.f32 %v56, %v109
  %111 = vmatmul.f32.gmra.mxu0 %v22
  %v112 = vpop.f32.mrf.mxu0
  %v113 = vadd.f32 %v56, %v112
  %114 = vmatmul.f32.gmra.mxu0 %v24
  %v115 = vpop.f32.mrf.mxu0
  %v116 = vadd.f32 %v56, %v115
  %117 = vmatmul.f32.gmra.mxu0 %v26
  %v118 = vpop.f32.mrf.mxu0
  %v119 = vadd.f32 %v56, %v118
  %120 = vmatmul.f32.gmra.mxu0 %v28
  %v121 = vpop.f32.mrf.mxu0
  %v122 = vadd.f32 %v56, %v121
  %123 = vdwg.mxu0
  %124 = vmatpush.msra.mxu0 0.0
  %125 = vmatpush.msra.mxu0 0.0
  %126 = vmatpush.msra.mxu0 0.0
  %127 = vmatpush.msra.mxu0 0.0
  %128 = vmatpush.msra.mxu0 0.0
  %129 = vmatpush.msra.mxu0 0.0
  %130 = vmatpush.msra.mxu0 0.0
  %131 = vmatpush.msra.mxu0 0.0
  %132 = vmatpush.msra.mxu0 %v53
  %133 = vmatpush.msra.mxu0 %v52
  %134 = vmatpush.msra.mxu0 %v51
  %135 = vmatpush.msra.mxu0 %v50
  %136 = vmatpush.msra.mxu0 %v49
  %137 = vmatpush.msra.mxu0 %v48
  %138 = vmatpush.msra.mxu0 %v47
  %139 = vmatpush.msra.mxu0 %v46
  %140 = vmatmul.f32.gmra.mxu0 %v60
  %v141 = vpop.f32.mrf.mxu0
  %v142 = vadd.f32 %v101, %v141
  %143 = vmatmul.f32.gmra.mxu0 %v63
  %v144 = vpop.f32.mrf.mxu0
  %v145 = vadd.f32 %v104, %v144
  %146 = vmatmul.f32.gmra.mxu0 %v66
  %v147 = vpop.f32.mrf.mxu0
  %v148 = vadd.f32 %v107, %v147
  %149 = vmatmul.f32.gmra.mxu0 %v69
  %v150 = vpop.f32.mrf.mxu0
  %v151 = vadd.f32 %v110, %v150
  %152 = vmatmul.f32.gmra.mxu0 %v72
  %v153 = vpop.f32.mrf.mxu0
  %v154 = vadd.f32 %v113, %v153
  %155 = vmatmul.f32.gmra.mxu0 %v75
  %v156 = vpop.f32.mrf.mxu0
  %v157 = vadd.f32 %v116, %v156
  %158 = vmatmul.f32.gmra.mxu0 %v78
  %v159 = vpop.f32.mrf.mxu0
  %v160 = vadd.f32 %v119, %v159
  %161 = vmatmul.f32.gmra.mxu0 %v81
  %v162 = vpop.f32.mrf.mxu0
  %v163 = vadd.f32 %v122, %v162
  %164 = vdwg.mxu0
  %vm165 = vcmask 15360
  %166 = vst.msk [vmem:[%s3] sm:$0xff] %vm165, %v142
  %167 = vst.msk [vmem:[%s3 + $0x8] sm:$0xff] %vm165, %v145
  %168 = vst.msk [vmem:[%s3 + $0x10] sm:$0xff] %vm165, %v148
  %169 = vst.msk [vmem:[%s3 + $0x18] sm:$0xff] %vm165, %v151
  %170 = vst.msk [vmem:[%s3 + $0x20] sm:$0xff] %vm165, %v154
  %171 = vst.msk [vmem:[%s3 + $0x28] sm:$0xff] %vm165, %v157
  %172 = vst.msk [vmem:[%s3 + $0x30] sm:$0xff] %vm165, %v160
  %vm173 = vcmask 9216
  %174 = vst.msk [vmem:[%s3 + $0x38] sm:$0x3] %vm173, %v163
  // Predicated region
  $region14: #{noise_remover_forward.11} parent=0 // pred_check
    _
  $region15: #{noise_remover_forward.11} parent=0 // pred_check_branch
    %176 = sbr.rel (0) target = $region17
  $region16: #{noise_remover_forward.11} parent=0 // pred_region
    _
  $region17: #{noise_remover_forward.11} parent=0 // pred_fallthru
    _
  // Predicated region
  $region18: #{noise_remover_forward.11} parent=0 // pred_check
    _
  $region19: #{noise_remover_forward.11} parent=0 // pred_check_branch
    %178 = sbr.rel (0) target = $region21
  $region20: #{noise_remover_forward.11} parent=0 // pred_region
    _
  $region21: #{noise_remover_forward.11} parent=0 // pred_fallthru
    _

</llo_original>
